<compile_context>
chip_gen: v7x
topology: tpu7x:2x2x1
jax: 0.10.0
libtpu: 0.0.40
codegen_flags: <defaults>
</compile_context>

<pallas_src>
import functools

import jax
import jax.numpy as jnp
from jax.experimental import pallas as pl
from jax.experimental.pallas import tpu as pltpu

# ----------------------------- problem sizes -----------------------------
BATCH = 2
INPLANES = 64
PLANES = 64
SCALE = 8
WIDTH = PLANES // SCALE            # 8
NUMS = SCALE - 1                   # 7
KSIZE = 3
DILATION = 2
SEQ = 128                          # time steps per sample
SE_BOTTLENECK = 128


# ----------------------------- fused Bottle2neck kernel -----------------------------
def bottle2neck_kernel(x_ref, w1_ref, cw_ref, w3_ref, sew1_ref, sew2_ref,
                       vec_ref, bvec_ref, seb1_ref, pool_ref, expand_ref,
                       o_ref, *, dilation, width, nums, seq):
    d = dilation
    L = x_ref.shape[1]                                   # B * T lanes

    x = x_ref[...]                                       # (C_in, L) f32
    x16 = x.astype(jnp.bfloat16)

    # packed per-channel vectors: [b1_fold, bn1_shift, b3_fold, bn3_shift, se_b2]
    b1 = vec_ref[:, 0:1]
    t1 = vec_ref[:, 1:2]
    b3 = vec_ref[:, 2:3]
    t3 = vec_ref[:, 3:4]
    se_b2 = vec_ref[:, 4:5]

    # conv1 (1x1, BN1 scale pre-folded into weights) -> ReLU -> + BN1 shift
    h = jnp.dot(w1_ref[...], x16, preferred_element_type=jnp.float32) + b1
    h = jnp.maximum(h, 0.0) + t1                         # (C_mid, L) f32

    # Per-sample time position of every lane (batch is folded onto lanes); the masks
    # stop the dilated taps from reading padding or crossing a sample boundary.
    lane = jax.lax.broadcasted_iota(jnp.int32, (width, L), 1)
    t_pos = lane % seq
    left_ok = t_pos >= d                                 # x[t-d] exists
    right_ok = t_pos < seq - d                           # x[t+d] exists

    # hierarchical Res2Net branches (sequential dependency across branches)
    outs = []
    sp = None
    for i in range(nums):
        blk = h[i * width:(i + 1) * width, :]            # (width, L)
        sp = blk if i == 0 else sp + blk
        xm = jnp.where(left_ok, pltpu.roll(sp, shift=d, axis=1), 0.0)       # x[t-d]
        xp = jnp.where(right_ok, pltpu.roll(sp, shift=L - d, axis=1), 0.0)  # x[t+d]
        stacked = jnp.concatenate([xm, sp, xp], axis=0).astype(jnp.bfloat16)
        y = jnp.dot(cw_ref[i], stacked, preferred_element_type=jnp.float32)
        y = y + bvec_ref[i, :, 0:1]                      # folded conv+BN-scale bias
        sp = jnp.maximum(y, 0.0) + bvec_ref[i, :, 1:2]   # ReLU -> + BN_i shift
        outs.append(sp)
    outs.append(h[nums * width:, :])                     # untouched last split
    cat = jnp.concatenate(outs, axis=0).astype(jnp.bfloat16)   # (C_mid, L)

    # conv3 (1x1) -> ReLU -> + BN3 shift
    z = jnp.dot(w3_ref[...], cat, preferred_element_type=jnp.float32) + b3
    z = jnp.maximum(z, 0.0) + t3                         # (C, L) f32

    # SE block for both samples at once:
    #   pool (C,L)->(C,B), two dense layers as (.,B) matmuls, gate broadcast (C,B)->(C,L)
    s = jnp.dot(z, pool_ref[...], preferred_element_type=jnp.float32)       # (C, B)
    u = jnp.dot(sew1_ref[...], s.astype(jnp.bfloat16),
                preferred_element_type=jnp.float32) + seb1_ref[...]
    u = jnp.maximum(u, 0.0)                                                  # (bneck, B)
    g = jnp.dot(sew2_ref[...], u.astype(jnp.bfloat16),
                preferred_element_type=jnp.float32) + se_b2
    g = 1.0 / (1.0 + jnp.exp(-g))                                            # (C, B)
    gate = jnp.dot(g, expand_ref[...], preferred_element_type=jnp.float32)   # (C, L)

    # channel gate + residual add (no final ReLU in the reference module)
    o_ref[...] = (z * gate + x).astype(o_ref.dtype)


# ----------------------------- host-side parameter folding -----------------------------
def fold_params(p):
    """Fold eval-mode BN into the preceding conv.

    BN(ReLU(Wx+b)) == ReLU((s*W)x + s*b) + shift, valid because the folded scale
    s = gamma/sqrt(var+eps) is strictly positive (checked in __main__).
    """
    f = {}
    f["w1"] = p["bn1_s"][:, None] * p["w1"]
    f["b1"] = p["bn1_s"] * p["b1"]
    f["t1"] = p["bn1_b"]
    f["convs_w"] = p["bns_s"][:, :, None, None] * p["convs_w"]   # (NUMS, W, W, K)
    f["convs_b"] = p["bns_s"] * p["convs_b"]
    f["ts"] = p["bns_b"]
    f["w3"] = p["bn3_s"][:, None] * p["w3"]
    f["b3"] = p["bn3_s"] * p["b3"]
    f["t3"] = p["bn3_b"]
    return f


def bottle2neck_forward(x, p):
    batch, c_in, seq = x.shape
    L = batch * seq
    c_mid = WIDTH * SCALE
    bf16 = jnp.bfloat16
    f = fold_params(p)

    # Batch folded onto the lane axis: (B, C, T) -> (C, B*T) slab.
    x_slab = jnp.transpose(x, (1, 0, 2)).reshape(c_in, L)

    # 3 conv taps folded into the contraction dim: columns [x(t-d) | x(t) | x(t+d)].
    cw = jnp.concatenate([f["convs_w"][..., k] for k in range(KSIZE)], axis=-1)  # (NUMS,W,3W)

    # Pack the small per-channel vectors to minimise entry DMAs.
    vec64 = jnp.stack([f["b1"], f["t1"], f["b3"], f["t3"], p["se_b2"]], axis=1)  # (C, 5)
    bvec = jnp.stack([f["convs_b"], f["ts"]], axis=-1)                           # (NUMS, W, 2)

    # Per-sample average-pool / gate-broadcast matrices (block structure over lanes).
    idx = jnp.arange(L)
    pool = jnp.zeros((L, batch), jnp.float32).at[idx, idx // seq].set(1.0 / seq)
    expand = jnp.zeros((batch, L), jnp.float32).at[idx // seq, idx].set(1.0)

    args = (
        x_slab,
        f["w1"].astype(bf16), cw.astype(bf16), f["w3"].astype(bf16),
        p["se_w1"].astype(bf16), p["se_w2"].astype(bf16),
        vec64, bvec, p["se_b1"][:, None],
        pool, expand,
    )

    flops = 2 * (c_mid * c_in * L                               # conv1
                 + NUMS * WIDTH * (KSIZE * WIDTH) * L           # dilated branch convs
                 + PLANES * c_mid * L                           # conv3
                 + 2 * SE_BOTTLENECK * PLANES * batch           # SE dense layers
                 + 2 * PLANES * L)                              # pool + gate broadcast
    flops += 10 * PLANES * L                                    # elementwise
    bytes_accessed = sum(int(a.size) * a.dtype.itemsize for a in args) + PLANES * L * 4

    vmem = functools.partial(pl.BlockSpec, memory_space=pltpu.MemorySpace.VMEM)
    kernel = functools.partial(bottle2neck_kernel, dilation=DILATION,
                               width=WIDTH, nums=NUMS, seq=seq)

    out_slab = pl.pallas_call(
        kernel,
        out_shape=jax.ShapeDtypeStruct((PLANES, L), x.dtype),
        in_specs=[vmem() for _ in args],
        out_specs=vmem(),
        cost_estimate=pl.CostEstimate(
            flops=int(flops),
            transcendentals=int(PLANES * batch),
            bytes_accessed=int(bytes_accessed)),
    )(*args)

    # (C, B*T) slab -> (B, C, T)
    return out_slab.reshape(PLANES, batch, seq).transpose(1, 0, 2)


# ----------------------------- pure-JAX references -----------------------------
def reference_forward_f32(x, p):
    """Full-f32 reference following the PyTorch op order exactly (eval-mode BN)."""
    hp = jax.lax.Precision.HIGHEST
    d, w, T = DILATION, WIDTH, x.shape[-1]

    h = jnp.einsum("oi,bit->bot", p["w1"], x, precision=hp) + p["b1"][None, :, None]
    h = jnp.maximum(h, 0.0)
    h = h * p["bn1_s"][None, :, None] + p["bn1_b"][None, :, None]

    outs, sp = [], None
    for i in range(NUMS):
        blk = h[:, i * w:(i + 1) * w, :]
        sp = blk if i == 0 else sp + blk
        pad = jnp.pad(sp, ((0, 0), (0, 0), (d, d)))
        wt = p["convs_w"][i]                                      # (w, w, 3)
        y = (jnp.einsum("oi,bit->bot", wt[:, :, 0], pad[:, :, 0:T], precision=hp)
             + jnp.einsum("oi,bit->bot", wt[:, :, 1], pad[:, :, d:d + T], precision=hp)
             + jnp.einsum("oi,bit->bot", wt[:, :, 2], pad[:, :, 2 * d:2 * d + T], precision=hp))
        y = y + p["convs_b"][i][None, :, None]
        y = jnp.maximum(y, 0.0)
        sp = y * p["bns_s"][i][None, :, None] + p["bns_b"][i][None, :, None]
        outs.append(sp)
    outs.append(h[:, NUMS * w:, :])
    cat = jnp.concatenate(outs, axis=1)

    z = jnp.einsum("oi,bit->bot", p["w3"], cat, precision=hp) + p["b3"][None, :, None]
    z = jnp.maximum(z, 0.0)
    z = z * p["bn3_s"][None, :, None] + p["bn3_b"][None, :, None]

    s = jnp.mean(z, axis=2)
    u = jnp.maximum(jnp.einsum("oc,bc->bo", p["se_w1"], s, precision=hp) + p["se_b1"][None], 0.0)
    g = jax.nn.sigmoid(jnp.einsum("co,bo->bc", p["se_w2"], u, precision=hp) + p["se_b2"][None])
    return z * g[:, :, None] + x


def reference_forward_bf16(x, p):
    """Mirrors the kernel's numerics (BN scale folded into weights, bf16 MXU operands,
    f32 accumulation and f32 elementwise) with an independent pad-based conv impl."""
    bf = jnp.bfloat16
    f = fold_params(p)
    d, w, T = DILATION, WIDTH, x.shape[-1]

    def mm(wm, a):  # (O,I) x (B,I,T) -> (B,O,T), bf16 operands, f32 accumulate
        return jnp.einsum("oi,bit->bot", wm.astype(bf), a.astype(bf),
                          preferred_element_type=jnp.float32)

    h = jnp.maximum(mm(f["w1"], x) + f["b1"][None, :, None], 0.0) + f["t1"][None, :, None]
    outs, sp = [], None
    for i in range(NUMS):
        blk = h[:, i * w:(i + 1) * w, :]
        sp = blk if i == 0 else sp + blk
        pad = jnp.pad(sp, ((0, 0), (0, 0), (d, d)))
        taps = jnp.concatenate([pad[:, :, 0:T], pad[:, :, d:d + T],
                                pad[:, :, 2 * d:2 * d + T]], axis=1)
        wcat = jnp.concatenate([f["convs_w"][i][:, :, k] for k in range(KSIZE)], axis=-1)
        y = mm(wcat, taps) + f["convs_b"][i][None, :, None]
        sp = jnp.maximum(y, 0.0) + f["ts"][i][None, :, None]
        outs.append(sp)
    outs.append(h[:, NUMS * w:, :])
    cat = jnp.concatenate(outs, axis=1)

    z = jnp.maximum(mm(f["w3"], cat) + f["b3"][None, :, None], 0.0) + f["t3"][None, :, None]

    s = jnp.mean(z, axis=2)
    u = jnp.maximum(jnp.einsum("oc,bc->bo", p["se_w1"].astype(bf), s.astype(bf),
                               preferred_element_type=jnp.float32) + p["se_b1"][None], 0.0)
    g = jax.nn.sigmoid(jnp.einsum("co,bo->bc", p["se_w2"].astype(bf), u.astype(bf),
                                  preferred_element_type=jnp.float32) + p["se_b2"][None])
    return z * g[:, :, None] + x


# ----------------------------- deterministic params -----------------------------
def make_params(key):
    c_in, c_mid, c_out = INPLANES, WIDTH * SCALE, PLANES
    ks = jax.random.split(key, 13)

    def w_init(k, shape, fan_in):
        return jax.random.normal(k, shape, jnp.float32) / jnp.sqrt(float(fan_in))

    def bn_fold(k, c):                       # eval-mode BN folded into scale/shift
        k1, k2, k3, k4 = jax.random.split(k, 4)
        gamma = jax.random.uniform(k1, (c,), jnp.float32, 0.5, 1.5)
        beta = 0.1 * jax.random.normal(k2, (c,), jnp.float32)
        mean = 0.1 * jax.random.normal(k3, (c,), jnp.float32)
        var = jax.random.uniform(k4, (c,), jnp.float32, 0.5, 1.5)
        scale = gamma / jnp.sqrt(var + 1e-5)
        return scale, beta - mean * scale

    p = {}
    p["w1"] = w_init(ks[0], (c_mid, c_in), c_in)
    p["b1"] = 0.05 * jax.random.normal(ks[1], (c_mid,), jnp.float32)
    p["bn1_s"], p["bn1_b"] = bn_fold(ks[2], c_mid)
    p["convs_w"] = w_init(ks[3], (NUMS, WIDTH, WIDTH, KSIZE), WIDTH * KSIZE)
    p["convs_b"] = 0.05 * jax.random.normal(ks[4], (NUMS, WIDTH), jnp.float32)
    bs, bb = zip(*[bn_fold(k, WIDTH) for k in jax.random.split(ks[5], NUMS)])
    p["bns_s"], p["bns_b"] = jnp.stack(bs), jnp.stack(bb)
    p["w3"] = w_init(ks[6], (c_out, c_mid), c_mid)
    p["b3"] = 0.05 * jax.random.normal(ks[7], (c_out,), jnp.float32)
    p["bn3_s"], p["bn3_b"] = bn_fold(ks[8], c_out)
    p["se_w1"] = w_init(ks[9], (SE_BOTTLENECK, c_out), c_out)
    p["se_b1"] = 0.05 * jax.random.normal(ks[10], (SE_BOTTLENECK,), jnp.float32)
    p["se_w2"] = w_init(ks[11], (c_out, SE_BOTTLENECK), SE_BOTTLENECK)
    p["se_b2"] = 0.05 * jax.random.normal(ks[12], (c_out,), jnp.float32)
    return p


if __name__ == "__main__":
    key = jax.random.PRNGKey(0)
    k_x, k_p = jax.random.split(key)
    x = jax.random.normal(k_x, (BATCH, INPLANES, SEQ), jnp.float32)
    params = make_params(k_p)

    # The BN-scale-into-weights fold requires a strictly positive folded scale.
    assert bool(jnp.all(params["bn1_s"] > 0) & jnp.all(params["bns_s"] > 0)
                & jnp.all(params["bn3_s"] > 0))

    out = jax.block_until_ready(bottle2neck_forward(x, params))
    ref16 = jax.block_until_ready(reference_forward_bf16(x, params))
    ref32 = jax.block_until_ready(reference_forward_f32(x, params))

    assert out.shape == (BATCH, PLANES, SEQ)
    assert bool(jnp.all(jnp.isfinite(out)))
    # Tight check vs a reference using the same bf16-MXU / f32-accumulate numerics.
    assert jnp.allclose(out, ref16, atol=1e-2, rtol=1e-2), float(jnp.max(jnp.abs(out - ref16)))
    # Loose sanity bound vs the full-f32 PyTorch-order reference (bf16 quantization only).
    assert jnp.allclose(out, ref32, atol=3e-1, rtol=1e-1), float(jnp.max(jnp.abs(out - ref32)))
    print("KERNEL_OK")
</pallas_src>

<mosaic_0001>
module attributes {stable_mosaic.version = 11 : i64} {
  func.func @bottle2neck_kernel(%arg0: memref<64x256xf32, #tpu.memory_space<vmem>>, %arg1: memref<64x64xbf16, #tpu.memory_space<vmem>>, %arg2: memref<7x8x24xbf16, #tpu.memory_space<vmem>>, %arg3: memref<64x64xbf16, #tpu.memory_space<vmem>>, %arg4: memref<128x64xbf16, #tpu.memory_space<vmem>>, %arg5: memref<64x128xbf16, #tpu.memory_space<vmem>>, %arg6: memref<64x5xf32, #tpu.memory_space<vmem>>, %arg7: memref<7x8x2xf32, #tpu.memory_space<vmem>>, %arg8: memref<128x1xf32, #tpu.memory_space<vmem>>, %arg9: memref<256x2xf32, #tpu.memory_space<vmem>>, %arg10: memref<2x256xf32, #tpu.memory_space<vmem>>, %arg11: memref<64x256xf32, #tpu.memory_space<vmem>>) attributes {dimension_semantics = [], scalar_prefetch = 0 : i64, scratch_operands = 0 : i64, tpu.core_type = #tpu.core_type<tc>} {
    %c0 = arith.constant 0 : index
    %c0_0 = arith.constant 0 : index
    %0 = vector.load %arg0[%c0, %c0_0] : memref<64x256xf32, #tpu.memory_space<vmem>>, vector<64x256xf32>
    %1 = arith.truncf %0 : vector<64x256xf32> to vector<64x256xbf16>
    %c0_1 = arith.constant 0 : index
    %c0_2 = arith.constant 0 : index
    %2 = vector.load %arg6[%c0_1, %c0_2] : memref<64x5xf32, #tpu.memory_space<vmem>>, vector<64x1xf32>
    %c0_3 = arith.constant 0 : index
    %c1 = arith.constant 1 : index
    %3 = vector.load %arg6[%c0_3, %c1] : memref<64x5xf32, #tpu.memory_space<vmem>>, vector<64x1xf32>
    %c0_4 = arith.constant 0 : index
    %c2 = arith.constant 2 : index
    %4 = vector.load %arg6[%c0_4, %c2] : memref<64x5xf32, #tpu.memory_space<vmem>>, vector<64x1xf32>
    %c0_5 = arith.constant 0 : index
    %c3 = arith.constant 3 : index
    %5 = vector.load %arg6[%c0_5, %c3] : memref<64x5xf32, #tpu.memory_space<vmem>>, vector<64x1xf32>
    %c0_6 = arith.constant 0 : index
    %c4 = arith.constant 4 : index
    %6 = vector.load %arg6[%c0_6, %c4] : memref<64x5xf32, #tpu.memory_space<vmem>>, vector<64x1xf32>
    %c0_7 = arith.constant 0 : index
    %c0_8 = arith.constant 0 : index
    %7 = vector.load %arg1[%c0_7, %c0_8] : memref<64x64xbf16, #tpu.memory_space<vmem>>, vector<64x64xbf16>
    %cst = arith.constant dense<0.000000e+00> : vector<64x256xf32>
    %8 = tpu.matmul %7, %1, %cst {dimension_numbers = #tpu.dot_dimension_numbers<[1], [0], [0], [1], [0, 0, 1, 1], [], []>} : vector<64x64xbf16>, vector<64x256xbf16>, vector<64x256xf32> -> vector<64x256xf32>
    %9 = vector.broadcast %2 : vector<64x1xf32> to vector<64x256xf32>
    %10 = arith.addf %8, %9 : vector<64x256xf32>
    %cst_9 = arith.constant 0.000000e+00 : f32
    %11 = vector.broadcast %cst_9 : f32 to vector<64x256xf32>
    %12 = arith.maximumf %10, %11 : vector<64x256xf32>
    %13 = vector.broadcast %3 : vector<64x1xf32> to vector<64x256xf32>
    %14 = arith.addf %12, %13 : vector<64x256xf32>
    %15 = tpu.iota {dimensions = array<i32: 1>} : vector<8x256xi32>
    %c128_i32 = arith.constant 128 : i32
    %c0_i32 = arith.constant 0 : i32
    %16 = arith.cmpi eq, %c128_i32, %c0_i32 : i32
    %c1_i32 = arith.constant 1 : i32
    %17 = arith.select %16, %c1_i32, %c128_i32 : i32
    %18 = vector.broadcast %17 : i32 to vector<8x256xi32>
    %19 = arith.remsi %15, %18 : vector<8x256xi32>
    %c0_i32_10 = arith.constant 0 : i32
    %20 = vector.broadcast %c0_i32_10 : i32 to vector<8x256xi32>
    %21 = arith.cmpi ne, %19, %20 : vector<8x256xi32>
    %c0_i32_11 = arith.constant 0 : i32
    %22 = vector.broadcast %c0_i32_11 : i32 to vector<8x256xi32>
    %23 = arith.cmpi slt, %19, %22 : vector<8x256xi32>
    %c0_i32_12 = arith.constant 0 : i32
    %24 = arith.cmpi slt, %17, %c0_i32_12 : i32
    %25 = vector.broadcast %24 : i1 to vector<8x256xi1>
    %26 = vector.broadcast %25 : vector<8x256xi1> to vector<8x256xi1>
    %27 = arith.xori %23, %26 : vector<8x256xi1>
    %28 = arith.andi %27, %21 : vector<8x256xi1>
    %29 = vector.broadcast %17 : i32 to vector<8x256xi32>
    %30 = arith.addi %19, %29 : vector<8x256xi32>
    %31 = arith.select %28, %30, %19 : vector<8x256xi1>, vector<8x256xi32>
    %c2_i32 = arith.constant 2 : i32
    %32 = vector.broadcast %c2_i32 : i32 to vector<8x256xi32>
    %33 = arith.cmpi sge, %31, %32 : vector<8x256xi32>
    %c126_i32 = arith.constant 126 : i32
    %34 = vector.broadcast %c126_i32 : i32 to vector<8x256xi32>
    %35 = arith.cmpi slt, %31, %34 : vector<8x256xi32>
    %36 = vector.extract_strided_slice %14 {offsets = [0, 0], sizes = [8, 256], strides = [1, 1]} : vector<64x256xf32> to vector<8x256xf32>
    %c2_i32_13 = arith.constant 2 : i32
    %37 = tpu.dynamic_rotate %36 by %c2_i32_13 dim 1 : vector<8x256xf32>, i32 -> vector<8x256xf32>
    %cst_14 = arith.constant 0.000000e+00 : f32
    %38 = vector.broadcast %cst_14 : f32 to vector<8x256xf32>
    %39 = arith.select %33, %37, %38 : vector<8x256xi1>, vector<8x256xf32>
    %c254_i32 = arith.constant 254 : i32
    %40 = tpu.dynamic_rotate %36 by %c254_i32 dim 1 : vector<8x256xf32>, i32 -> vector<8x256xf32>
    %cst_15 = arith.constant 0.000000e+00 : f32
    %41 = vector.broadcast %cst_15 : f32 to vector<8x256xf32>
    %42 = arith.select %35, %40, %41 : vector<8x256xi1>, vector<8x256xf32>
    %43 = tpu.concatenate %39, %36, %42 in 0 : vector<8x256xf32>, vector<8x256xf32>, vector<8x256xf32> -> vector<24x256xf32>
    %44 = arith.truncf %43 : vector<24x256xf32> to vector<24x256xbf16>
    %c0_16 = arith.constant 0 : index
    %c0_17 = arith.constant 0 : index
    %c0_18 = arith.constant 0 : index
    %45 = vector.load %arg2[%c0_16, %c0_17, %c0_18] : memref<7x8x24xbf16, #tpu.memory_space<vmem>>, vector<1x8x24xbf16>
    %46 = vector.shape_cast %45 : vector<1x8x24xbf16> to vector<8x24xbf16>
    %cst_19 = arith.constant dense<0.000000e+00> : vector<8x256xf32>
    %47 = tpu.matmul %46, %44, %cst_19 {dimension_numbers = #tpu.dot_dimension_numbers<[1], [0], [0], [1], [0, 0, 1, 1], [], []>} : vector<8x24xbf16>, vector<24x256xbf16>, vector<8x256xf32> -> vector<8x256xf32>
    %c0_20 = arith.constant 0 : index
    %c0_21 = arith.constant 0 : index
    %c0_22 = arith.constant 0 : index
    %48 = vector.load %arg7[%c0_20, %c0_21, %c0_22] : memref<7x8x2xf32, #tpu.memory_space<vmem>>, vector<1x8x1xf32>
    %49 = vector.shape_cast %48 : vector<1x8x1xf32> to vector<8x1xf32>
    %50 = vector.broadcast %49 : vector<8x1xf32> to vector<8x256xf32>
    %51 = arith.addf %47, %50 : vector<8x256xf32>
    %cst_23 = arith.constant 0.000000e+00 : f32
    %52 = vector.broadcast %cst_23 : f32 to vector<8x256xf32>
    %53 = arith.maximumf %51, %52 : vector<8x256xf32>
    %c0_24 = arith.constant 0 : index
    %c0_25 = arith.constant 0 : index
    %c1_26 = arith.constant 1 : index
    %54 = vector.load %arg7[%c0_24, %c0_25, %c1_26] : memref<7x8x2xf32, #tpu.memory_space<vmem>>, vector<1x8x1xf32>
    %55 = vector.shape_cast %54 : vector<1x8x1xf32> to vector<8x1xf32>
    %56 = vector.broadcast %55 : vector<8x1xf32> to vector<8x256xf32>
    %57 = arith.addf %53, %56 : vector<8x256xf32>
    %58 = vector.extract_strided_slice %14 {offsets = [8, 0], sizes = [8, 256], strides = [1, 1]} : vector<64x256xf32> to vector<8x256xf32>
    %59 = arith.addf %57, %58 : vector<8x256xf32>
    %c2_i32_27 = arith.constant 2 : i32
    %60 = tpu.dynamic_rotate %59 by %c2_i32_27 dim 1 : vector<8x256xf32>, i32 -> vector<8x256xf32>
    %cst_28 = arith.constant 0.000000e+00 : f32
    %61 = vector.broadcast %cst_28 : f32 to vector<8x256xf32>
    %62 = arith.select %33, %60, %61 : vector<8x256xi1>, vector<8x256xf32>
    %c254_i32_29 = arith.constant 254 : i32
    %63 = tpu.dynamic_rotate %59 by %c254_i32_29 dim 1 : vector<8x256xf32>, i32 -> vector<8x256xf32>
    %cst_30 = arith.constant 0.000000e+00 : f32
    %64 = vector.broadcast %cst_30 : f32 to vector<8x256xf32>
    %65 = arith.select %35, %63, %64 : vector<8x256xi1>, vector<8x256xf32>
    %66 = tpu.concatenate %62, %59, %65 in 0 : vector<8x256xf32>, vector<8x256xf32>, vector<8x256xf32> -> vector<24x256xf32>
    %67 = arith.truncf %66 : vector<24x256xf32> to vector<24x256xbf16>
    %c1_31 = arith.constant 1 : index
    %c0_32 = arith.constant 0 : index
    %c0_33 = arith.constant 0 : index
    %68 = vector.load %arg2[%c1_31, %c0_32, %c0_33] : memref<7x8x24xbf16, #tpu.memory_space<vmem>>, vector<1x8x24xbf16>
    %69 = vector.shape_cast %68 : vector<1x8x24xbf16> to vector<8x24xbf16>
    %cst_34 = arith.constant dense<0.000000e+00> : vector<8x256xf32>
    %70 = tpu.matmul %69, %67, %cst_34 {dimension_numbers = #tpu.dot_dimension_numbers<[1], [0], [0], [1], [0, 0, 1, 1], [], []>} : vector<8x24xbf16>, vector<24x256xbf16>, vector<8x256xf32> -> vector<8x256xf32>
    %c1_35 = arith.constant 1 : index
    %c0_36 = arith.constant 0 : index
    %c0_37 = arith.constant 0 : index
    %71 = vector.load %arg7[%c1_35, %c0_36, %c0_37] : memref<7x8x2xf32, #tpu.memory_space<vmem>>, vector<1x8x1xf32>
    %72 = vector.shape_cast %71 : vector<1x8x1xf32> to vector<8x1xf32>
    %73 = vector.broadcast %72 : vector<8x1xf32> to vector<8x256xf32>
    %74 = arith.addf %70, %73 : vector<8x256xf32>
    %cst_38 = arith.constant 0.000000e+00 : f32
    %75 = vector.broadcast %cst_38 : f32 to vector<8x256xf32>
    %76 = arith.maximumf %74, %75 : vector<8x256xf32>
    %c1_39 = arith.constant 1 : index
    %c0_40 = arith.constant 0 : index
    %c1_41 = arith.constant 1 : index
    %77 = vector.load %arg7[%c1_39, %c0_40, %c1_41] : memref<7x8x2xf32, #tpu.memory_space<vmem>>, vector<1x8x1xf32>
    %78 = vector.shape_cast %77 : vector<1x8x1xf32> to vector<8x1xf32>
    %79 = vector.broadcast %78 : vector<8x1xf32> to vector<8x256xf32>
    %80 = arith.addf %76, %79 : vector<8x256xf32>
    %81 = vector.extract_strided_slice %14 {offsets = [16, 0], sizes = [8, 256], strides = [1, 1]} : vector<64x256xf32> to vector<8x256xf32>
    %82 = arith.addf %80, %81 : vector<8x256xf32>
    %c2_i32_42 = arith.constant 2 : i32
    %83 = tpu.dynamic_rotate %82 by %c2_i32_42 dim 1 : vector<8x256xf32>, i32 -> vector<8x256xf32>
    %cst_43 = arith.constant 0.000000e+00 : f32
    %84 = vector.broadcast %cst_43 : f32 to vector<8x256xf32>
    %85 = arith.select %33, %83, %84 : vector<8x256xi1>, vector<8x256xf32>
    %c254_i32_44 = arith.constant 254 : i32
    %86 = tpu.dynamic_rotate %82 by %c254_i32_44 dim 1 : vector<8x256xf32>, i32 -> vector<8x256xf32>
    %cst_45 = arith.constant 0.000000e+00 : f32
    %87 = vector.broadcast %cst_45 : f32 to vector<8x256xf32>
    %88 = arith.select %35, %86, %87 : vector<8x256xi1>, vector<8x256xf32>
    %89 = tpu.concatenate %85, %82, %88 in 0 : vector<8x256xf32>, vector<8x256xf32>, vector<8x256xf32> -> vector<24x256xf32>
    %90 = arith.truncf %89 : vector<24x256xf32> to vector<24x256xbf16>
    %c2_46 = arith.constant 2 : index
    %c0_47 = arith.constant 0 : index
    %c0_48 = arith.constant 0 : index
    %91 = vector.load %arg2[%c2_46, %c0_47, %c0_48] : memref<7x8x24xbf16, #tpu.memory_space<vmem>>, vector<1x8x24xbf16>
    %92 = vector.shape_cast %91 : vector<1x8x24xbf16> to vector<8x24xbf16>
    %cst_49 = arith.constant dense<0.000000e+00> : vector<8x256xf32>
    %93 = tpu.matmul %92, %90, %cst_49 {dimension_numbers = #tpu.dot_dimension_numbers<[1], [0], [0], [1], [0, 0, 1, 1], [], []>} : vector<8x24xbf16>, vector<24x256xbf16>, vector<8x256xf32> -> vector<8x256xf32>
    %c2_50 = arith.constant 2 : index
    %c0_51 = arith.constant 0 : index
    %c0_52 = arith.constant 0 : index
    %94 = vector.load %arg7[%c2_50, %c0_51, %c0_52] : memref<7x8x2xf32, #tpu.memory_space<vmem>>, vector<1x8x1xf32>
    %95 = vector.shape_cast %94 : vector<1x8x1xf32> to vector<8x1xf32>
    %96 = vector.broadcast %95 : vector<8x1xf32> to vector<8x256xf32>
    %97 = arith.addf %93, %96 : vector<8x256xf32>
    %cst_53 = arith.constant 0.000000e+00 : f32
    %98 = vector.broadcast %cst_53 : f32 to vector<8x256xf32>
    %99 = arith.maximumf %97, %98 : vector<8x256xf32>
    %c2_54 = arith.constant 2 : index
    %c0_55 = arith.constant 0 : index
    %c1_56 = arith.constant 1 : index
    %100 = vector.load %arg7[%c2_54, %c0_55, %c1_56] : memref<7x8x2xf32, #tpu.memory_space<vmem>>, vector<1x8x1xf32>
    %101 = vector.shape_cast %100 : vector<1x8x1xf32> to vector<8x1xf32>
    %102 = vector.broadcast %101 : vector<8x1xf32> to vector<8x256xf32>
    %103 = arith.addf %99, %102 : vector<8x256xf32>
    %104 = vector.extract_strided_slice %14 {offsets = [24, 0], sizes = [8, 256], strides = [1, 1]} : vector<64x256xf32> to vector<8x256xf32>
    %105 = arith.addf %103, %104 : vector<8x256xf32>
    %c2_i32_57 = arith.constant 2 : i32
    %106 = tpu.dynamic_rotate %105 by %c2_i32_57 dim 1 : vector<8x256xf32>, i32 -> vector<8x256xf32>
    %cst_58 = arith.constant 0.000000e+00 : f32
    %107 = vector.broadcast %cst_58 : f32 to vector<8x256xf32>
    %108 = arith.select %33, %106, %107 : vector<8x256xi1>, vector<8x256xf32>
    %c254_i32_59 = arith.constant 254 : i32
    %109 = tpu.dynamic_rotate %105 by %c254_i32_59 dim 1 : vector<8x256xf32>, i32 -> vector<8x256xf32>
    %cst_60 = arith.constant 0.000000e+00 : f32
    %110 = vector.broadcast %cst_60 : f32 to vector<8x256xf32>
    %111 = arith.select %35, %109, %110 : vector<8x256xi1>, vector<8x256xf32>
    %112 = tpu.concatenate %108, %105, %111 in 0 : vector<8x256xf32>, vector<8x256xf32>, vector<8x256xf32> -> vector<24x256xf32>
    %113 = arith.truncf %112 : vector<24x256xf32> to vector<24x256xbf16>
    %c3_61 = arith.constant 3 : index
    %c0_62 = arith.constant 0 : index
    %c0_63 = arith.constant 0 : index
    %114 = vector.load %arg2[%c3_61, %c0_62, %c0_63] : memref<7x8x24xbf16, #tpu.memory_space<vmem>>, vector<1x8x24xbf16>
    %115 = vector.shape_cast %114 : vector<1x8x24xbf16> to vector<8x24xbf16>
    %cst_64 = arith.constant dense<0.000000e+00> : vector<8x256xf32>
    %116 = tpu.matmul %115, %113, %cst_64 {dimension_numbers = #tpu.dot_dimension_numbers<[1], [0], [0], [1], [0, 0, 1, 1], [], []>} : vector<8x24xbf16>, vector<24x256xbf16>, vector<8x256xf32> -> vector<8x256xf32>
    %c3_65 = arith.constant 3 : index
    %c0_66 = arith.constant 0 : index
    %c0_67 = arith.constant 0 : index
    %117 = vector.load %arg7[%c3_65, %c0_66, %c0_67] : memref<7x8x2xf32, #tpu.memory_space<vmem>>, vector<1x8x1xf32>
    %118 = vector.shape_cast %117 : vector<1x8x1xf32> to vector<8x1xf32>
    %119 = vector.broadcast %118 : vector<8x1xf32> to vector<8x256xf32>
    %120 = arith.addf %116, %119 : vector<8x256xf32>
    %cst_68 = arith.constant 0.000000e+00 : f32
    %121 = vector.broadcast %cst_68 : f32 to vector<8x256xf32>
    %122 = arith.maximumf %120, %121 : vector<8x256xf32>
    %c3_69 = arith.constant 3 : index
    %c0_70 = arith.constant 0 : index
    %c1_71 = arith.constant 1 : index
    %123 = vector.load %arg7[%c3_69, %c0_70, %c1_71] : memref<7x8x2xf32, #tpu.memory_space<vmem>>, vector<1x8x1xf32>
    %124 = vector.shape_cast %123 : vector<1x8x1xf32> to vector<8x1xf32>
    %125 = vector.broadcast %124 : vector<8x1xf32> to vector<8x256xf32>
    %126 = arith.addf %122, %125 : vector<8x256xf32>
    %127 = vector.extract_strided_slice %14 {offsets = [32, 0], sizes = [8, 256], strides = [1, 1]} : vector<64x256xf32> to vector<8x256xf32>
    %128 = arith.addf %126, %127 : vector<8x256xf32>
    %c2_i32_72 = arith.constant 2 : i32
    %129 = tpu.dynamic_rotate %128 by %c2_i32_72 dim 1 : vector<8x256xf32>, i32 -> vector<8x256xf32>
    %cst_73 = arith.constant 0.000000e+00 : f32
    %130 = vector.broadcast %cst_73 : f32 to vector<8x256xf32>
    %131 = arith.select %33, %129, %130 : vector<8x256xi1>, vector<8x256xf32>
    %c254_i32_74 = arith.constant 254 : i32
    %132 = tpu.dynamic_rotate %128 by %c254_i32_74 dim 1 : vector<8x256xf32>, i32 -> vector<8x256xf32>
    %cst_75 = arith.constant 0.000000e+00 : f32
    %133 = vector.broadcast %cst_75 : f32 to vector<8x256xf32>
    %134 = arith.select %35, %132, %133 : vector<8x256xi1>, vector<8x256xf32>
    %135 = tpu.concatenate %131, %128, %134 in 0 : vector<8x256xf32>, vector<8x256xf32>, vector<8x256xf32> -> vector<24x256xf32>
    %136 = arith.truncf %135 : vector<24x256xf32> to vector<24x256xbf16>
    %c4_76 = arith.constant 4 : index
    %c0_77 = arith.constant 0 : index
    %c0_78 = arith.constant 0 : index
    %137 = vector.load %arg2[%c4_76, %c0_77, %c0_78] : memref<7x8x24xbf16, #tpu.memory_space<vmem>>, vector<1x8x24xbf16>
    %138 = vector.shape_cast %137 : vector<1x8x24xbf16> to vector<8x24xbf16>
    %cst_79 = arith.constant dense<0.000000e+00> : vector<8x256xf32>
    %139 = tpu.matmul %138, %136, %cst_79 {dimension_numbers = #tpu.dot_dimension_numbers<[1], [0], [0], [1], [0, 0, 1, 1], [], []>} : vector<8x24xbf16>, vector<24x256xbf16>, vector<8x256xf32> -> vector<8x256xf32>
    %c4_80 = arith.constant 4 : index
    %c0_81 = arith.constant 0 : index
    %c0_82 = arith.constant 0 : index
    %140 = vector.load %arg7[%c4_80, %c0_81, %c0_82] : memref<7x8x2xf32, #tpu.memory_space<vmem>>, vector<1x8x1xf32>
    %141 = vector.shape_cast %140 : vector<1x8x1xf32> to vector<8x1xf32>
    %142 = vector.broadcast %141 : vector<8x1xf32> to vector<8x256xf32>
    %143 = arith.addf %139, %142 : vector<8x256xf32>
    %cst_83 = arith.constant 0.000000e+00 : f32
    %144 = vector.broadcast %cst_83 : f32 to vector<8x256xf32>
    %145 = arith.maximumf %143, %144 : vector<8x256xf32>
    %c4_84 = arith.constant 4 : index
    %c0_85 = arith.constant 0 : index
    %c1_86 = arith.constant 1 : index
    %146 = vector.load %arg7[%c4_84, %c0_85, %c1_86] : memref<7x8x2xf32, #tpu.memory_space<vmem>>, vector<1x8x1xf32>
    %147 = vector.shape_cast %146 : vector<1x8x1xf32> to vector<8x1xf32>
    %148 = vector.broadcast %147 : vector<8x1xf32> to vector<8x256xf32>
    %149 = arith.addf %145, %148 : vector<8x256xf32>
    %150 = vector.extract_strided_slice %14 {offsets = [40, 0], sizes = [8, 256], strides = [1, 1]} : vector<64x256xf32> to vector<8x256xf32>
    %151 = arith.addf %149, %150 : vector<8x256xf32>
    %c2_i32_87 = arith.constant 2 : i32
    %152 = tpu.dynamic_rotate %151 by %c2_i32_87 dim 1 : vector<8x256xf32>, i32 -> vector<8x256xf32>
    %cst_88 = arith.constant 0.000000e+00 : f32
    %153 = vector.broadcast %cst_88 : f32 to vector<8x256xf32>
    %154 = arith.select %33, %152, %153 : vector<8x256xi1>, vector<8x256xf32>
    %c254_i32_89 = arith.constant 254 : i32
    %155 = tpu.dynamic_rotate %151 by %c254_i32_89 dim 1 : vector<8x256xf32>, i32 -> vector<8x256xf32>
    %cst_90 = arith.constant 0.000000e+00 : f32
    %156 = vector.broadcast %cst_90 : f32 to vector<8x256xf32>
    %157 = arith.select %35, %155, %156 : vector<8x256xi1>, vector<8x256xf32>
    %158 = tpu.concatenate %154, %151, %157 in 0 : vector<8x256xf32>, vector<8x256xf32>, vector<8x256xf32> -> vector<24x256xf32>
    %159 = arith.truncf %158 : vector<24x256xf32> to vector<24x256xbf16>
    %c5 = arith.constant 5 : index
    %c0_91 = arith.constant 0 : index
    %c0_92 = arith.constant 0 : index
    %160 = vector.load %arg2[%c5, %c0_91, %c0_92] : memref<7x8x24xbf16, #tpu.memory_space<vmem>>, vector<1x8x24xbf16>
    %161 = vector.shape_cast %160 : vector<1x8x24xbf16> to vector<8x24xbf16>
    %cst_93 = arith.constant dense<0.000000e+00> : vector<8x256xf32>
    %162 = tpu.matmul %161, %159, %cst_93 {dimension_numbers = #tpu.dot_dimension_numbers<[1], [0], [0], [1], [0, 0, 1, 1], [], []>} : vector<8x24xbf16>, vector<24x256xbf16>, vector<8x256xf32> -> vector<8x256xf32>
    %c5_94 = arith.constant 5 : index
    %c0_95 = arith.constant 0 : index
    %c0_96 = arith.constant 0 : index
    %163 = vector.load %arg7[%c5_94, %c0_95, %c0_96] : memref<7x8x2xf32, #tpu.memory_space<vmem>>, vector<1x8x1xf32>
    %164 = vector.shape_cast %163 : vector<1x8x1xf32> to vector<8x1xf32>
    %165 = vector.broadcast %164 : vector<8x1xf32> to vector<8x256xf32>
    %166 = arith.addf %162, %165 : vector<8x256xf32>
    %cst_97 = arith.constant 0.000000e+00 : f32
    %167 = vector.broadcast %cst_97 : f32 to vector<8x256xf32>
    %168 = arith.maximumf %166, %167 : vector<8x256xf32>
    %c5_98 = arith.constant 5 : index
    %c0_99 = arith.constant 0 : index
    %c1_100 = arith.constant 1 : index
    %169 = vector.load %arg7[%c5_98, %c0_99, %c1_100] : memref<7x8x2xf32, #tpu.memory_space<vmem>>, vector<1x8x1xf32>
    %170 = vector.shape_cast %169 : vector<1x8x1xf32> to vector<8x1xf32>
    %171 = vector.broadcast %170 : vector<8x1xf32> to vector<8x256xf32>
    %172 = arith.addf %168, %171 : vector<8x256xf32>
    %173 = vector.extract_strided_slice %14 {offsets = [48, 0], sizes = [8, 256], strides = [1, 1]} : vector<64x256xf32> to vector<8x256xf32>
    %174 = arith.addf %172, %173 : vector<8x256xf32>
    %c2_i32_101 = arith.constant 2 : i32
    %175 = tpu.dynamic_rotate %174 by %c2_i32_101 dim 1 : vector<8x256xf32>, i32 -> vector<8x256xf32>
    %cst_102 = arith.constant 0.000000e+00 : f32
    %176 = vector.broadcast %cst_102 : f32 to vector<8x256xf32>
    %177 = arith.select %33, %175, %176 : vector<8x256xi1>, vector<8x256xf32>
    %c254_i32_103 = arith.constant 254 : i32
    %178 = tpu.dynamic_rotate %174 by %c254_i32_103 dim 1 : vector<8x256xf32>, i32 -> vector<8x256xf32>
    %cst_104 = arith.constant 0.000000e+00 : f32
    %179 = vector.broadcast %cst_104 : f32 to vector<8x256xf32>
    %180 = arith.select %35, %178, %179 : vector<8x256xi1>, vector<8x256xf32>
    %181 = tpu.concatenate %177, %174, %180 in 0 : vector<8x256xf32>, vector<8x256xf32>, vector<8x256xf32> -> vector<24x256xf32>
    %182 = arith.truncf %181 : vector<24x256xf32> to vector<24x256xbf16>
    %c6 = arith.constant 6 : index
    %c0_105 = arith.constant 0 : index
    %c0_106 = arith.constant 0 : index
    %183 = vector.load %arg2[%c6, %c0_105, %c0_106] : memref<7x8x24xbf16, #tpu.memory_space<vmem>>, vector<1x8x24xbf16>
    %184 = vector.shape_cast %183 : vector<1x8x24xbf16> to vector<8x24xbf16>
    %cst_107 = arith.constant dense<0.000000e+00> : vector<8x256xf32>
    %185 = tpu.matmul %184, %182, %cst_107 {dimension_numbers = #tpu.dot_dimension_numbers<[1], [0], [0], [1], [0, 0, 1, 1], [], []>} : vector<8x24xbf16>, vector<24x256xbf16>, vector<8x256xf32> -> vector<8x256xf32>
    %c6_108 = arith.constant 6 : index
    %c0_109 = arith.constant 0 : index
    %c0_110 = arith.constant 0 : index
    %186 = vector.load %arg7[%c6_108, %c0_109, %c0_110] : memref<7x8x2xf32, #tpu.memory_space<vmem>>, vector<1x8x1xf32>
    %187 = vector.shape_cast %186 : vector<1x8x1xf32> to vector<8x1xf32>
    %188 = vector.broadcast %187 : vector<8x1xf32> to vector<8x256xf32>
    %189 = arith.addf %185, %188 : vector<8x256xf32>
    %cst_111 = arith.constant 0.000000e+00 : f32
    %190 = vector.broadcast %cst_111 : f32 to vector<8x256xf32>
    %191 = arith.maximumf %189, %190 : vector<8x256xf32>
    %c6_112 = arith.constant 6 : index
    %c0_113 = arith.constant 0 : index
    %c1_114 = arith.constant 1 : index
    %192 = vector.load %arg7[%c6_112, %c0_113, %c1_114] : memref<7x8x2xf32, #tpu.memory_space<vmem>>, vector<1x8x1xf32>
    %193 = vector.shape_cast %192 : vector<1x8x1xf32> to vector<8x1xf32>
    %194 = vector.broadcast %193 : vector<8x1xf32> to vector<8x256xf32>
    %195 = arith.addf %191, %194 : vector<8x256xf32>
    %196 = vector.extract_strided_slice %14 {offsets = [56, 0], sizes = [8, 256], strides = [1, 1]} : vector<64x256xf32> to vector<8x256xf32>
    %197 = tpu.concatenate %57, %80, %103, %126, %149, %172, %195, %196 in 0 : vector<8x256xf32>, vector<8x256xf32>, vector<8x256xf32>, vector<8x256xf32>, vector<8x256xf32>, vector<8x256xf32>, vector<8x256xf32>, vector<8x256xf32> -> vector<64x256xf32>
    %198 = arith.truncf %197 : vector<64x256xf32> to vector<64x256xbf16>
    %c0_115 = arith.constant 0 : index
    %c0_116 = arith.constant 0 : index
    %199 = vector.load %arg3[%c0_115, %c0_116] : memref<64x64xbf16, #tpu.memory_space<vmem>>, vector<64x64xbf16>
    %cst_117 = arith.constant dense<0.000000e+00> : vector<64x256xf32>
    %200 = tpu.matmul %199, %198, %cst_117 {dimension_numbers = #tpu.dot_dimension_numbers<[1], [0], [0], [1], [0, 0, 1, 1], [], []>} : vector<64x64xbf16>, vector<64x256xbf16>, vector<64x256xf32> -> vector<64x256xf32>
    %201 = vector.broadcast %4 : vector<64x1xf32> to vector<64x256xf32>
    %202 = arith.addf %200, %201 : vector<64x256xf32>
    %cst_118 = arith.constant 0.000000e+00 : f32
    %203 = vector.broadcast %cst_118 : f32 to vector<64x256xf32>
    %204 = arith.maximumf %202, %203 : vector<64x256xf32>
    %205 = vector.broadcast %5 : vector<64x1xf32> to vector<64x256xf32>
    %206 = arith.addf %204, %205 : vector<64x256xf32>
    %c0_119 = arith.constant 0 : index
    %c0_120 = arith.constant 0 : index
    %207 = vector.load %arg9[%c0_119, %c0_120] : memref<256x2xf32, #tpu.memory_space<vmem>>, vector<256x2xf32>
    %cst_121 = arith.constant dense<0.000000e+00> : vector<64x2xf32>
    %208 = tpu.matmul %206, %207, %cst_121 {dimension_numbers = #tpu.dot_dimension_numbers<[1], [0], [0], [1], [0, 0, 1, 1], [], []>} : vector<64x256xf32>, vector<256x2xf32>, vector<64x2xf32> -> vector<64x2xf32>
    %c0_122 = arith.constant 0 : index
    %c0_123 = arith.constant 0 : index
    %209 = vector.load %arg4[%c0_122, %c0_123] : memref<128x64xbf16, #tpu.memory_space<vmem>>, vector<128x64xbf16>
    %210 = arith.truncf %208 : vector<64x2xf32> to vector<64x2xbf16>
    %cst_124 = arith.constant dense<0.000000e+00> : vector<128x2xf32>
    %211 = tpu.matmul %209, %210, %cst_124 {dimension_numbers = #tpu.dot_dimension_numbers<[1], [0], [0], [1], [0, 0, 1, 1], [], []>} : vector<128x64xbf16>, vector<64x2xbf16>, vector<128x2xf32> -> vector<128x2xf32>
    %c0_125 = arith.constant 0 : index
    %c0_126 = arith.constant 0 : index
    %212 = vector.load %arg8[%c0_125, %c0_126] : memref<128x1xf32, #tpu.memory_space<vmem>>, vector<128x1xf32>
    %213 = vector.broadcast %212 : vector<128x1xf32> to vector<128x2xf32>
    %214 = arith.addf %211, %213 : vector<128x2xf32>
    %cst_127 = arith.constant 0.000000e+00 : f32
    %215 = vector.broadcast %cst_127 : f32 to vector<128x2xf32>
    %216 = arith.maximumf %214, %215 : vector<128x2xf32>
    %c0_128 = arith.constant 0 : index
    %c0_129 = arith.constant 0 : index
    %217 = vector.load %arg5[%c0_128, %c0_129] : memref<64x128xbf16, #tpu.memory_space<vmem>>, vector<64x128xbf16>
    %218 = arith.truncf %216 : vector<128x2xf32> to vector<128x2xbf16>
    %cst_130 = arith.constant dense<0.000000e+00> : vector<64x2xf32>
    %219 = tpu.matmul %217, %218, %cst_130 {dimension_numbers = #tpu.dot_dimension_numbers<[1], [0], [0], [1], [0, 0, 1, 1], [], []>} : vector<64x128xbf16>, vector<128x2xbf16>, vector<64x2xf32> -> vector<64x2xf32>
    %220 = vector.broadcast %6 : vector<64x1xf32> to vector<64x2xf32>
    %221 = arith.addf %219, %220 : vector<64x2xf32>
    %cst_131 = arith.constant 0.000000e+00 : f32
    %222 = vector.broadcast %cst_131 : f32 to vector<64x2xf32>
    %223 = arith.subf %222, %221 : vector<64x2xf32>
    %224 = math.exp %223 : vector<64x2xf32>
    %cst_132 = arith.constant 1.000000e+00 : f32
    %225 = vector.broadcast %cst_132 : f32 to vector<64x2xf32>
    %226 = arith.addf %225, %224 : vector<64x2xf32>
    %cst_133 = arith.constant 1.000000e+00 : f32
    %227 = vector.broadcast %cst_133 : f32 to vector<64x2xf32>
    %228 = arith.divf %227, %226 : vector<64x2xf32>
    %c0_134 = arith.constant 0 : index
    %c0_135 = arith.constant 0 : index
    %229 = vector.load %arg10[%c0_134, %c0_135] : memref<2x256xf32, #tpu.memory_space<vmem>>, vector<2x256xf32>
    %cst_136 = arith.constant dense<0.000000e+00> : vector<64x256xf32>
    %230 = tpu.matmul %228, %229, %cst_136 {dimension_numbers = #tpu.dot_dimension_numbers<[1], [0], [0], [1], [0, 0, 1, 1], [], []>} : vector<64x2xf32>, vector<2x256xf32>, vector<64x256xf32> -> vector<64x256xf32>
    %231 = arith.mulf %206, %230 : vector<64x256xf32>
    %232 = arith.addf %231, %0 : vector<64x256xf32>
    %c0_137 = arith.constant 0 : index
    %c0_138 = arith.constant 0 : index
    %233 = vector.load %arg11[%c0_137, %c0_138] : memref<64x256xf32, #tpu.memory_space<vmem>>, vector<64x256xf32>
    tpu.vector_store %arg11[%c0_137, %c0_138], %232 {strides = array<i32>} : memref<64x256xf32, #tpu.memory_space<vmem>>, vector<64x256xf32>,
    return
  }
}

</mosaic_0001>

<llo_original>
// kernel: tpu_custom_call.1
$region0: #{tpu_custom_call.1}
  #allocation0 [shape = 'u32[]', space=smem, size = 0x4, offset = 0x4, fixed_abs, tag = 'smem constant byte address 0x4 - core index']
  #allocation1 [shape = 'u32[144,128]{1,0:T(1,128)}', space=vmem, size = 0x12000, scoped, tag = 'internal scratch']
  %s0 = inlined_call_operand.vmem [shape: f32[64,256], index: 0, kind: input, shape index: {}]
  %s1 = inlined_call_operand.vmem [shape: bf16[64,64], index: 1, kind: input, shape index: {}]
  %s2 = inlined_call_operand.vmem [shape: bf16[7,8,24], index: 2, kind: input, shape index: {}]
  %s3 = inlined_call_operand.vmem [shape: bf16[64,64], index: 3, kind: input, shape index: {}]
  %s4 = inlined_call_operand.vmem [shape: bf16[128,64], index: 4, kind: input, shape index: {}]
  %s5 = inlined_call_operand.vmem [shape: bf16[64,128], index: 5, kind: input, shape index: {}]
  %s6 = inlined_call_operand.vmem [shape: f32[64,5], index: 6, kind: input, shape index: {}]
  %s7 = inlined_call_operand.vmem [shape: f32[7,8,2], index: 7, kind: input, shape index: {}]
  %s8 = inlined_call_operand.vmem [shape: f32[128,1], index: 8, kind: input, shape index: {}]
  %s9 = inlined_call_operand.vmem [shape: f32[256,2], index: 9, kind: input, shape index: {}]
  %s10 = inlined_call_operand.vmem [shape: f32[2,256], index: 10, kind: input, shape index: {}]
  %s11 = inlined_call_operand.hbm [shape: f32[64,256], index: 11, kind: output, shape index: {}]
  %s12 = sld [smem:[#allocation0]]
  $region54: #{tpu_custom_call.1} parent=0
    _
  %s14 = ssub.s32 1, %s12
  %s15 = scalar_select 0, %s14, %s12
  $region1: #{tpu_custom_call.1} parent=0
    #allocation2 [shape = 'u8[65536]{0}', space=vmem, size = 0x10000, scoped, tag = 'output window, operand 0, single buffered']
    #allocation3 [shape = 's32[1]{0}', space=sflag, size = 0x4, scoped, tag = 'scoped memory for tpu_custom_call.1']
    %16 = vsyncpa [#allocation3], 0
    // Predicated region
    $region2: #{tpu_custom_call.1} parent=1 // pred_check
      _
    $region3: #{tpu_custom_call.1} parent=1 // pred_check_branch
      %18 = sbr.rel (0) target = $region5
    $region4: #{tpu_custom_call.1} parent=1 // pred_region
      _
    $region5: #{tpu_custom_call.1} parent=1 // pred_fallthru
      _
    // Predicated region
    $region6: #{tpu_custom_call.1} parent=1 // pred_check
      _
    $region7: #{tpu_custom_call.1} parent=1 // pred_check_branch
      %20 = sbr.rel (0) target = $region9
    $region8: #{tpu_custom_call.1} parent=1 // pred_region
      _
    $region9: #{tpu_custom_call.1} parent=1 // pred_fallthru
      _
    // Predicated region
    $region10: #{tpu_custom_call.1} parent=1 // pred_check
      _
    $region11: #{tpu_custom_call.1} parent=1 // pred_check_branch
      %22 = sbr.rel (0) target = $region13
    $region12: #{tpu_custom_call.1} parent=1 // pred_region
      _
    $region13: #{tpu_custom_call.1} parent=1 // pred_fallthru
      _
    // Predicated region
    $region14: #{tpu_custom_call.1} parent=1 // pred_check
      _
    $region15: #{tpu_custom_call.1} parent=1 // pred_check_branch
      %24 = sbr.rel (0) target = $region17
    $region16: #{tpu_custom_call.1} parent=1 // pred_region
      _
    $region17: #{tpu_custom_call.1} parent=1 // pred_fallthru
      _
    // Predicated region
    $region18: #{tpu_custom_call.1} parent=1 // pred_check
      _
    $region19: #{tpu_custom_call.1} parent=1 // pred_check_branch
      %26 = sbr.rel (0) target = $region21
    $region20: #{tpu_custom_call.1} parent=1 // pred_region
      _
    $region21: #{tpu_custom_call.1} parent=1 // pred_fallthru
      _
    // Predicated region
    $region22: #{tpu_custom_call.1} parent=1 // pred_check
      _
    $region23: #{tpu_custom_call.1} parent=1 // pred_check_branch
      %28 = sbr.rel (0) target = $region25
    $region24: #{tpu_custom_call.1} parent=1 // pred_region
      _
    $region25: #{tpu_custom_call.1} parent=1 // pred_fallthru
      _
    // Predicated region
    $region26: #{tpu_custom_call.1} parent=1 // pred_check
      _
    $region27: #{tpu_custom_call.1} parent=1 // pred_check_branch
      %30 = sbr.rel (0) target = $region29
    $region28: #{tpu_custom_call.1} parent=1 // pred_region
      _
    $region29: #{tpu_custom_call.1} parent=1 // pred_fallthru
      _
    // Predicated region
    $region30: #{tpu_custom_call.1} parent=1 // pred_check
      _
    $region31: #{tpu_custom_call.1} parent=1 // pred_check_branch
      %32 = sbr.rel (0) target = $region33
    $region32: #{tpu_custom_call.1} parent=1 // pred_region
      _
    $region33: #{tpu_custom_call.1} parent=1 // pred_fallthru
      _
    // Predicated region
    $region34: #{tpu_custom_call.1} parent=1 // pred_check
      _
    $region35: #{tpu_custom_call.1} parent=1 // pred_check_branch
      %34 = sbr.rel (0) target = $region37
    $region36: #{tpu_custom_call.1} parent=1 // pred_region
      _
    $region37: #{tpu_custom_call.1} parent=1 // pred_fallthru
      _
    // Predicated region
    $region38: #{tpu_custom_call.1} parent=1 // pred_check
      _
    $region39: #{tpu_custom_call.1} parent=1 // pred_check_branch
      %36 = sbr.rel (0) target = $region41
    $region40: #{tpu_custom_call.1} parent=1 // pred_region
      _
    $region41: #{tpu_custom_call.1} parent=1 // pred_fallthru
      _
    // Predicated region
    $region42: #{tpu_custom_call.1} parent=1 // pred_check
      _
    $region43: #{tpu_custom_call.1} parent=1 // pred_check_branch
      %38 = sbr.rel (0) target = $region45
    $region44: #{tpu_custom_call.1} parent=1 // pred_region
      _
    $region45: #{tpu_custom_call.1} parent=1 // pred_fallthru
      _
    %v40 = vld [vmem:[%s0] sm:$0xff]
    %v41 = vld [vmem:[%s0 + $0x8] sm:$0xff]
    %v42 = vld [vmem:[%s0 + $0x10] sm:$0xff]
    %v43 = vld [vmem:[%s0 + $0x18] sm:$0xff]
    %v44 = vld [vmem:[%s0 + $0x20] sm:$0xff]
    %v45 = vld [vmem:[%s0 + $0x28] sm:$0xff]
    %v46 = vld [vmem:[%s0 + $0x30] sm:$0xff]
    %v47 = vld [vmem:[%s0 + $0x38] sm:$0xff]
    %v48 = vld [vmem:[%s0 + $0x40] sm:$0xff]
    %v49 = vld [vmem:[%s0 + $0x48] sm:$0xff]
    %v50 = vld [vmem:[%s0 + $0x50] sm:$0xff]
    %v51 = vld [vmem:[%s0 + $0x58] sm:$0xff]
    %v52 = vld [vmem:[%s0 + $0x60] sm:$0xff]
    %v53 = vld [vmem:[%s0 + $0x68] sm:$0xff]
    %v54 = vld [vmem:[%s0 + $0x70] sm:$0xff]
    %v55 = vld [vmem:[%s0 + $0x78] sm:$0xff]
    %v56 = vpack.c.bf16 %v42, %v40
    %v57 = vpack.c.bf16 %v43, %v41
    %v58 = vpack.c.bf16 %v46, %v44
    %v59 = vpack.c.bf16 %v47, %v45
    %v60 = vpack.c.bf16 %v50, %v48
    %v61 = vpack.c.bf16 %v51, %v49
    %v62 = vpack.c.bf16 %v54, %v52
    %v63 = vpack.c.bf16 %v55, %v53
    %v64 = vld [vmem:[%s6] sm:$0xff]
    %v65 = vld [vmem:[%s6 + $0x8] sm:$0xff]
    %v66 = vld [vmem:[%s6 + $0x10] sm:$0xff]
    %v67 = vld [vmem:[%s6 + $0x18] sm:$0xff]
    %v68 = vld [vmem:[%s6 + $0x20] sm:$0xff]
    %v69 = vld [vmem:[%s6 + $0x28] sm:$0xff]
    %v70 = vld [vmem:[%s6 + $0x30] sm:$0xff]
    %v71 = vld [vmem:[%s6 + $0x38] sm:$0xff]
    %v72 = vld [vmem:[%s1] sm:$0xf]
    %v73 = vld [vmem:[%s1 + $0x4] sm:$0xf]
    %v74 = vld [vmem:[%s1 + $0x8] sm:$0xf]
    %v75 = vld [vmem:[%s1 + $0xc] sm:$0xf]
    %v76 = vld [vmem:[%s1 + $0x10] sm:$0xf]
    %v77 = vld [vmem:[%s1 + $0x14] sm:$0xf]
    %v78 = vld [vmem:[%s1 + $0x18] sm:$0xf]
    %v79 = vld [vmem:[%s1 + $0x1c] sm:$0xf]
    %81 = vset.pattern.permute.xlu0 0
    %82 = vperm.xlu0 %81, %v64
    %v83 = vpop.permute.xlu0 %82
    %86 = vset.pattern.permute.xlu0 0
    %87 = vperm.xlu0 %86, %v65
    %v88 = vpop.permute.xlu0 %87
    %91 = vset.pattern.permute.xlu0 0
    %92 = vperm.xlu0 %91, %v66
    %v93 = vpop.permute.xlu0 %92
    %96 = vset.pattern.permute.xlu0 0
    %97 = vperm.xlu0 %96, %v67
    %v98 = vpop.permute.xlu0 %97
    %101 = vset.pattern.permute.xlu0 0
    %102 = vperm.xlu0 %101, %v68
    %v103 = vpop.permute.xlu0 %102
    %106 = vset.pattern.permute.xlu0 0
    %107 = vperm.xlu0 %106, %v69
    %v108 = vpop.permute.xlu0 %107
    %111 = vset.pattern.permute.xlu0 0
    %112 = vperm.xlu0 %111, %v70
    %v113 = vpop.permute.xlu0 %112
    %116 = vset.pattern.permute.xlu0 0
    %117 = vperm.xlu0 %116, %v71
    %v118 = vpop.permute.xlu0 %117
    %v128 = vunpack.c.l.b16 %v72
    %v129 = vunpack.c.l.b16 %v73
    %v130 = vunpack.c.l.b16 %v74
    %v131 = vunpack.c.l.b16 %v75
    %v132 = vunpack.c.l.b16 %v76
    %v133 = vunpack.c.l.b16 %v77
    %v134 = vunpack.c.l.b16 %v78
    %v135 = vunpack.c.l.b16 %v79
    %v136 = vpack.c.b16 %v129, %v128
    %v137 = vpack.c.b16 %v131, %v130
    %v138 = vpack.c.b16 %v133, %v132
    %v139 = vpack.c.b16 %v135, %v134
    %vm140 = vcmask 523264
    %v142 = vsel %vm140, %v136, 0
    %v145 = vsel %vm140, %v137, 0
    %v148 = vsel %vm140, %v138, 0
    %v151 = vsel %vm140, %v139, 0
    %153 = vmatprep.subr.bf16.mxu0 %v57
    %154 = vmatpush1.bf16.msra.mxu0 %v56
    %155 = vmatprep.subr.bf16.mxu0 %v59
    %156 = vmatpush1.bf16.msra.mxu0 %v58
    %157 = vmatprep.subr.bf16.mxu0 %v61
    %158 = vmatpush1.bf16.msra.mxu0 %v60
    %159 = vmatprep.subr.bf16.mxu0 %v63
    %160 = vmatpush1.bf16.msra.mxu0 %v62
    %161 = vmatprep.subr.bf16.mxu0 0
    %162 = vmatpush1.bf16.msra.mxu0 0
    %163 = vmatprep.subr.bf16.mxu0 0
    %164 = vmatpush1.bf16.msra.mxu0 0
    %165 = vmatprep.subr.bf16.mxu0 0
    %166 = vmatpush1.bf16.msra.mxu0 0
    %167 = vmatprep.subr.bf16.mxu0 0
    %168 = vmatpush1.bf16.msra.mxu0 0
    %169 = vmatprep.subr.bf16.mxu0 0
    %170 = vmatpush1.bf16.msra.mxu0 0
    %171 = vmatprep.subr.bf16.mxu0 0
    %172 = vmatpush1.bf16.msra.mxu0 0
    %173 = vmatprep.subr.bf16.mxu0 0
    %174 = vmatpush1.bf16.msra.mxu0 0
    %175 = vmatprep.subr.bf16.mxu0 0
    %176 = vmatpush1.bf16.msra.mxu0 0
    %177 = vmatprep.subr.bf16.mxu0 0
    %178 = vmatpush1.bf16.msra.mxu0 0
    %179 = vmatprep.subr.bf16.mxu0 0
    %180 = vmatpush1.bf16.msra.mxu0 0
    %181 = vmatprep.subr.bf16.mxu0 0
    %182 = vmatpush1.bf16.msra.mxu0 0
    %183 = vmatprep.subr.bf16.mxu0 0
    %184 = vmatpush1.bf16.msra.mxu0 0
    %185 = vmatprep.mubr.bf16.mxu0 0
    %186 = vmatmul.mubr.bf16.gmra.mrb[0].mxu0 %v142
    %v187 = vpop.f32.mrb[0].mxu0
    %v188 = vadd.f32 %v83, %v187
    %v189 = vpop.f32.mrb[0].mxu0
    %v190 = vadd.f32 %v83, %v189
    %v191 = vpop.f32.mrb[0].mxu0
    %v192 = vadd.f32 %v88, %v191
    %v193 = vpop.f32.mrb[0].mxu0
    %v194 = vadd.f32 %v88, %v193
    %195 = vmatprep.mubr.bf16.mxu0 0
    %196 = vmatmul.mubr.bf16.gmra.mrb[0].mxu0 %v145
    %v197 = vpop.f32.mrb[0].mxu0
    %v198 = vadd.f32 %v93, %v197
    %v199 = vpop.f32.mrb[0].mxu0
    %v200 = vadd.f32 %v93, %v199
    %v201 = vpop.f32.mrb[0].mxu0
    %v202 = vadd.f32 %v98, %v201
    %v203 = vpop.f32.mrb[0].mxu0
    %v204 = vadd.f32 %v98, %v203
    %205 = vmatprep.mubr.bf16.mxu0 0
    %206 = vmatmul.mubr.bf16.gmra.mrb[0].mxu0 %v148
    %v207 = vpop.f32.mrb[0].mxu0
    %v208 = vadd.f32 %v103, %v207
    %v209 = vpop.f32.mrb[0].mxu0
    %v210 = vadd.f32 %v103, %v209
    %v211 = vpop.f32.mrb[0].mxu0
    %v212 = vadd.f32 %v108, %v211
    %v213 = vpop.f32.mrb[0].mxu0
    %v214 = vadd.f32 %v108, %v213
    %215 = vmatprep.mubr.bf16.mxu0 0
    %216 = vmatmul.mubr.bf16.gmra.mrb[0].mxu0 %v151
    %v217 = vpop.f32.mrb[0].mxu0
    %v218 = vadd.f32 %v113, %v217
    %v219 = vpop.f32.mrb[0].mxu0
    %v220 = vadd.f32 %v113, %v219
    %v221 = vpop.f32.mrb[0].mxu0
    %v222 = vadd.f32 %v118, %v221
    %v223 = vpop.f32.mrb[0].mxu0
    %v224 = vadd.f32 %v118, %v223
    %225 = vdwg.mxu0
    %v226 = vmax.f32 %v188, 0.0
    %v227 = vmax.f32 %v190, 0.0
    %v228 = vmax.f32 %v192, 0.0
    %v229 = vmax.f32 %v194, 0.0
    %v230 = vmax.f32 %v198, 0.0
    %v231 = vmax.f32 %v200, 0.0
    %v232 = vmax.f32 %v202, 0.0
    %v233 = vmax.f32 %v204, 0.0
    %v234 = vmax.f32 %v208, 0.0
    %v235 = vmax.f32 %v210, 0.0
    %v236 = vmax.f32 %v212, 0.0
    %v237 = vmax.f32 %v214, 0.0
    %v238 = vmax.f32 %v218, 0.0
    %v239 = vmax.f32 %v220, 0.0
    %v240 = vmax.f32 %v222, 0.0
    %v241 = vmax.f32 %v224, 0.0
    %242 = vset.pattern.permute.xlu0 1
    %243 = vperm.xlu0 %242, %v64
    %v244 = vpop.permute.xlu0 %243
    %246 = vset.pattern.permute.xlu0 1
    %247 = vperm.xlu0 %246, %v65
    %v248 = vpop.permute.xlu0 %247
    %250 = vset.pattern.permute.xlu0 1
    %251 = vperm.xlu0 %250, %v66
    %v252 = vpop.permute.xlu0 %251
    %254 = vset.pattern.permute.xlu0 1
    %255 = vperm.xlu0 %254, %v67
    %v256 = vpop.permute.xlu0 %255
    %258 = vset.pattern.permute.xlu0 1
    %259 = vperm.xlu0 %258, %v68
    %v260 = vpop.permute.xlu0 %259
    %262 = vset.pattern.permute.xlu0 1
    %263 = vperm.xlu0 %262, %v69
    %v264 = vpop.permute.xlu0 %263
    %266 = vset.pattern.permute.xlu0 1
    %267 = vperm.xlu0 %266, %v70
    %v268 = vpop.permute.xlu0 %267
    %270 = vset.pattern.permute.xlu0 1
    %271 = vperm.xlu0 %270, %v71
    %v272 = vpop.permute.xlu0 %271
    %v274 = vadd.f32 %v226, %v244
    %v275 = vadd.f32 %v227, %v244
    %v276 = vadd.f32 %v228, %v248
    %v277 = vadd.f32 %v229, %v248
    %v278 = vadd.f32 %v230, %v252
    %v279 = vadd.f32 %v231, %v252
    %v280 = vadd.f32 %v232, %v256
    %v281 = vadd.f32 %v233, %v256
    %v282 = vadd.f32 %v234, %v260
    %v283 = vadd.f32 %v235, %v260
    %v284 = vadd.f32 %v236, %v264
    %v285 = vadd.f32 %v237, %v264
    %v286 = vadd.f32 %v238, %v268
    %v287 = vadd.f32 %v239, %v268
    %v288 = vadd.f32 %v240, %v272
    %v289 = vadd.f32 %v241, %v272
    %v290 = vlaneseq
    %v291 = vand.u32 %v290, 127
    %v292 = vadd.s32 %v291, 128
    %vm293 = vcmp.lt.s32.totalorder %v291, 0
    %v294 = vsub.s32 0, %v291
    %v295 = vsel %vm293, %v294, %v291
    %v296 = vshrl.u32 %v295, 7
    %v297 = vand.u32 %v295, 127
    %v298 = vsub.s32 0, %v297
    %v299 = vsel %vm293, %v298, %v297
    %vm300 = vcmp.lt.s32.totalorder %v292, 0
    %v301 = vsub.s32 0, %v292
    %v302 = vsel %vm300, %v301, %v292
    %v303 = vshrl.u32 %v302, 7
    %v304 = vand.u32 %v302, 127
    %v305 = vsub.s32 0, %v304
    %v306 = vsel %vm300, %v305, %v304
    %vm307 = vcmp.ne.s32.totalorder %v299, 0
    %vm308 = vcmp.ne.s32.totalorder %v306, 0
    %vm309 = vcmp.lt.s32.totalorder %v299, 0
    %vm310 = vcmp.lt.s32.totalorder %v306, 0
    %vm311 = vmand %vm309, %vm307
    %vm312 = vmand %vm310, %vm308
    %v313 = vadd.s32 %v299, 128
    %v314 = vadd.s32 %v306, 128
    %v315 = vsel %vm311, %v313, %v299
    %v316 = vsel %vm312, %v314, %v306
    %vm317 = vcmp.ge.s32.totalorder %v315, 2
    %vm318 = vcmp.ge.s32.totalorder %v316, 2
    %vm319 = vcmp.lt.s32.totalorder %v315, 126
    %vm320 = vcmp.lt.s32.totalorder %v316, 126
    %321 = vrot.lane.b32.xlu0 %v274, 2
    %v322 = vpop.permute.xlu0 %321
    %323 = vrot.lane.b32.xlu0 %v275, 2
    %v324 = vpop.permute.xlu0 %323
    %vm325 = vcmp.lt.s32.totalorder %v291, 2
    %v326 = vsel %vm325, %v322, %v324
    %v327 = vsel %vm325, %v324, %v322
    %v328 = vsel %vm317, %v327, 0.0
    %v329 = vsel %vm318, %v326, 0.0
    %330 = vrot.lane.b32.xlu0 %v274, 126
    %v331 = vpop.permute.xlu0 %330
    %332 = vrot.lane.b32.xlu0 %v275, 126
    %v333 = vpop.permute.xlu0 %332
    %vm334 = vcmp.lt.s32.totalorder %v291, 126
    %v335 = vsel %vm334, %v331, %v333
    %v336 = vsel %vm334, %v333, %v331
    %v337 = vsel %vm319, %v335, 0.0
    %v338 = vsel %vm320, %v336, 0.0
    %v339 = vpack.c.bf16 %v274, %v328
    %v340 = vpack.c.bf16 %v275, %v329
    %v341 = vpack.c.bf16 %v337, %v337
    %v342 = vpack.c.bf16 %v338, %v338
    %v343 = vld [vmem:[%s2] sm:$0xf]
    %v344 = vld [vmem:[%s7] sm:$0xff]
    %346 = vset.pattern.permute.xlu0 0
    %347 = vperm.xlu0 %346, %v344
    %v348 = vpop.permute.xlu0 %347
    %vm350 = vcmask 195584
    %v352 = vsel %vm350, %v343, 0
    %vm354 = vcmask 1043456
    %v356 = vsel %vm354, %v341, 0
    %v359 = vsel %vm354, %v342, 0
    %361 = vmatprep.subr.bf16.mxu0 %v340
    %362 = vmatpush1.bf16.msra.mxu0 %v339
    %363 = vmatprep.subr.bf16.mxu0 %v359
    %364 = vmatpush1.bf16.msra.mxu0 %v356
    %365 = vmatprep.subr.bf16.mxu0 0
    %366 = vmatpush1.bf16.msra.mxu0 0
    %367 = vmatprep.subr.bf16.mxu0 0
    %368 = vmatpush1.bf16.msra.mxu0 0
    %369 = vmatprep.subr.bf16.mxu0 0
    %370 = vmatpush1.bf16.msra.mxu0 0
    %371 = vmatprep.subr.bf16.mxu0 0
    %372 = vmatpush1.bf16.msra.mxu0 0
    %373 = vmatprep.subr.bf16.mxu0 0
    %374 = vmatpush1.bf16.msra.mxu0 0
    %375 = vmatprep.subr.bf16.mxu0 0
    %376 = vmatpush1.bf16.msra.mxu0 0
    %377 = vmatprep.subr.bf16.mxu0 0
    %378 = vmatpush1.bf16.msra.mxu0 0
    %379 = vmatprep.subr.bf16.mxu0 0
    %380 = vmatpush1.bf16.msra.mxu0 0
    %381 = vmatprep.subr.bf16.mxu0 0
    %382 = vmatpush1.bf16.msra.mxu0 0
    %383 = vmatprep.subr.bf16.mxu0 0
    %384 = vmatpush1.bf16.msra.mxu0 0
    %385 = vmatprep.subr.bf16.mxu0 0
    %386 = vmatpush1.bf16.msra.mxu0 0
    %387 = vmatprep.subr.bf16.mxu0 0
    %388 = vmatpush1.bf16.msra.mxu0 0
    %389 = vmatprep.subr.bf16.mxu0 0
    %390 = vmatpush1.bf16.msra.mxu0 0
    %391 = vmatprep.subr.bf16.mxu0 0
    %392 = vmatpush1.bf16.msra.mxu0 0
    %393 = vmatprep.mubr.bf16.mxu0 0
    %394 = vmatmul.mubr.bf16.gmra.mrb[0].mxu0 %v352
    %v395 = vpop.f32.mrb[0].mxu0
    %v396 = vadd.f32 %v348, %v395
    %v397 = vpop.f32.mrb[0].mxu0
    %v398 = vadd.f32 %v348, %v397
    %v399 = vpop.f32.mrb[0].mxu0
    %v400 = vpop.f32.mrb[0].mxu0
    %401 = vdwg.mxu0
    %v402 = vmax.f32 %v396, 0.0
    %v403 = vmax.f32 %v398, 0.0
    %404 = vset.pattern.permute.xlu0 1
    %405 = vperm.xlu0 %404, %v344
    %v406 = vpop.permute.xlu0 %405
    %v408 = vadd.f32 %v402, %v406
    %v409 = vadd.f32 %v403, %v406
    %v410 = vadd.f32 %v408, %v276
    %v411 = vadd.f32 %v409, %v277
    %412 = vrot.lane.b32.xlu0 %v410, 2
    %v413 = vpop.permute.xlu0 %412
    %414 = vrot.lane.b32.xlu0 %v411, 2
    %v415 = vpop.permute.xlu0 %414
    %v416 = vsel %vm325, %v413, %v415
    %v417 = vsel %vm325, %v415, %v413
    %v418 = vsel %vm317, %v417, 0.0
    %v419 = vsel %vm318, %v416, 0.0
    %420 = vrot.lane.b32.xlu0 %v410, 126
    %v421 = vpop.permute.xlu0 %420
    %422 = vrot.lane.b32.xlu0 %v411, 126
    %v423 = vpop.permute.xlu0 %422
    %v424 = vsel %vm334, %v421, %v423
    %v425 = vsel %vm334, %v423, %v421
    %v426 = vsel %vm319, %v424, 0.0
    %v427 = vsel %vm320, %v425, 0.0
    %v428 = vpack.c.bf16 %v410, %v418
    %v429 = vpack.c.bf16 %v411, %v419
    %v430 = vpack.c.bf16 %v426, %v426
    %v431 = vpack.c.bf16 %v427, %v427
    %s432 = scalar_lea.vmem %s2, 4
    %v433 = vld [vmem:[%s432] sm:$0xf]
    %s434 = scalar_lea.vmem %s7, 8
    %v435 = vld [vmem:[%s434] sm:$0xff]
    %437 = vset.pattern.permute.xlu0 0
    %438 = vperm.xlu0 %437, %v435
    %v439 = vpop.permute.xlu0 %438
    %v442 = vsel %vm350, %v433, 0
    %v445 = vsel %vm354, %v430, 0
    %v448 = vsel %vm354, %v431, 0
    %450 = vmatprep.subr.bf16.mxu0 %v429
    %451 = vmatpush1.bf16.msra.mxu0 %v428
    %452 = vmatprep.subr.bf16.mxu0 %v448
    %453 = vmatpush1.bf16.msra.mxu0 %v445
    %454 = vmatprep.subr.bf16.mxu0 0
    %455 = vmatpush1.bf16.msra.mxu0 0
    %456 = vmatprep.subr.bf16.mxu0 0
    %457 = vmatpush1.bf16.msra.mxu0 0
    %458 = vmatprep.subr.bf16.mxu0 0
    %459 = vmatpush1.bf16.msra.mxu0 0
    %460 = vmatprep.subr.bf16.mxu0 0
    %461 = vmatpush1.bf16.msra.mxu0 0
    %462 = vmatprep.subr.bf16.mxu0 0
    %463 = vmatpush1.bf16.msra.mxu0 0
    %464 = vmatprep.subr.bf16.mxu0 0
    %465 = vmatpush1.bf16.msra.mxu0 0
    %466 = vmatprep.subr.bf16.mxu0 0
    %467 = vmatpush1.bf16.msra.mxu0 0
    %468 = vmatprep.subr.bf16.mxu0 0
    %469 = vmatpush1.bf16.msra.mxu0 0
    %470 = vmatprep.subr.bf16.mxu0 0
    %471 = vmatpush1.bf16.msra.mxu0 0
    %472 = vmatprep.subr.bf16.mxu0 0
    %473 = vmatpush1.bf16.msra.mxu0 0
    %474 = vmatprep.subr.bf16.mxu0 0
    %475 = vmatpush1.bf16.msra.mxu0 0
    %476 = vmatprep.subr.bf16.mxu0 0
    %477 = vmatpush1.bf16.msra.mxu0 0
    %478 = vmatprep.subr.bf16.mxu0 0
    %479 = vmatpush1.bf16.msra.mxu0 0
    %480 = vmatprep.subr.bf16.mxu0 0
    %481 = vmatpush1.bf16.msra.mxu0 0
    %482 = vmatprep.mubr.bf16.mxu0 0
    %483 = vmatmul.mubr.bf16.gmra.mrb[0].mxu0 %v442
    %v484 = vpop.f32.mrb[0].mxu0
    %v485 = vadd.f32 %v439, %v484
    %v486 = vpop.f32.mrb[0].mxu0
    %v487 = vadd.f32 %v439, %v486
    %v488 = vpop.f32.mrb[0].mxu0
    %v489 = vpop.f32.mrb[0].mxu0
    %490 = vdwg.mxu0
    %v491 = vmax.f32 %v485, 0.0
    %v492 = vmax.f32 %v487, 0.0
    %493 = vset.pattern.permute.xlu0 1
    %494 = vperm.xlu0 %493, %v435
    %v495 = vpop.permute.xlu0 %494
    %v497 = vadd.f32 %v491, %v495
    %v498 = vadd.f32 %v492, %v495
    %v499 = vadd.f32 %v497, %v278
    %v500 = vadd.f32 %v498, %v279
    %501 = vrot.lane.b32.xlu0 %v499, 2
    %v502 = vpop.permute.xlu0 %501
    %503 = vrot.lane.b32.xlu0 %v500, 2
    %v504 = vpop.permute.xlu0 %503
    %v505 = vsel %vm325, %v502, %v504
    %v506 = vsel %vm325, %v504, %v502
    %v507 = vsel %vm317, %v506, 0.0
    %v508 = vsel %vm318, %v505, 0.0
    %509 = vrot.lane.b32.xlu0 %v499, 126
    %v510 = vpop.permute.xlu0 %509
    %511 = vrot.lane.b32.xlu0 %v500, 126
    %v512 = vpop.permute.xlu0 %511
    %v513 = vsel %vm334, %v510, %v512
    %v514 = vsel %vm334, %v512, %v510
    %v515 = vsel %vm319, %v513, 0.0
    %v516 = vsel %vm320, %v514, 0.0
    %v517 = vpack.c.bf16 %v499, %v507
    %v518 = vpack.c.bf16 %v500, %v508
    %v519 = vpack.c.bf16 %v515, %v515
    %v520 = vpack.c.bf16 %v516, %v516
    %s521 = scalar_lea.vmem %s2, 8
    %v522 = vld [vmem:[%s521] sm:$0xf]
    %s523 = scalar_lea.vmem %s7, 16
    %v524 = vld [vmem:[%s523] sm:$0xff]
    %526 = vset.pattern.permute.xlu0 0
    %527 = vperm.xlu0 %526, %v524
    %v528 = vpop.permute.xlu0 %527
    %v531 = vsel %vm350, %v522, 0
    %v534 = vsel %vm354, %v519, 0
    %v537 = vsel %vm354, %v520, 0
    %539 = vmatprep.subr.bf16.mxu0 %v518
    %540 = vmatpush1.bf16.msra.mxu0 %v517
    %541 = vmatprep.subr.bf16.mxu0 %v537
    %542 = vmatpush1.bf16.msra.mxu0 %v534
    %543 = vmatprep.subr.bf16.mxu0 0
    %544 = vmatpush1.bf16.msra.mxu0 0
    %545 = vmatprep.subr.bf16.mxu0 0
    %546 = vmatpush1.bf16.msra.mxu0 0
    %547 = vmatprep.subr.bf16.mxu0 0
    %548 = vmatpush1.bf16.msra.mxu0 0
    %549 = vmatprep.subr.bf16.mxu0 0
    %550 = vmatpush1.bf16.msra.mxu0 0
    %551 = vmatprep.subr.bf16.mxu0 0
    %552 = vmatpush1.bf16.msra.mxu0 0
    %553 = vmatprep.subr.bf16.mxu0 0
    %554 = vmatpush1.bf16.msra.mxu0 0
    %555 = vmatprep.subr.bf16.mxu0 0
    %556 = vmatpush1.bf16.msra.mxu0 0
    %557 = vmatprep.subr.bf16.mxu0 0
    %558 = vmatpush1.bf16.msra.mxu0 0
    %559 = vmatprep.subr.bf16.mxu0 0
    %560 = vmatpush1.bf16.msra.mxu0 0
    %561 = vmatprep.subr.bf16.mxu0 0
    %562 = vmatpush1.bf16.msra.mxu0 0
    %563 = vmatprep.subr.bf16.mxu0 0
    %564 = vmatpush1.bf16.msra.mxu0 0
    %565 = vmatprep.subr.bf16.mxu0 0
    %566 = vmatpush1.bf16.msra.mxu0 0
    %567 = vmatprep.subr.bf16.mxu0 0
    %568 = vmatpush1.bf16.msra.mxu0 0
    %569 = vmatprep.subr.bf16.mxu0 0
    %570 = vmatpush1.bf16.msra.mxu0 0
    %571 = vmatprep.mubr.bf16.mxu0 0
    %572 = vmatmul.mubr.bf16.gmra.mrb[0].mxu0 %v531
    %v573 = vpop.f32.mrb[0].mxu0
    %v574 = vadd.f32 %v528, %v573
    %v575 = vpop.f32.mrb[0].mxu0
    %v576 = vadd.f32 %v528, %v575
    %v577 = vpop.f32.mrb[0].mxu0
    %v578 = vpop.f32.mrb[0].mxu0
    %579 = vdwg.mxu0
    %v580 = vmax.f32 %v574, 0.0
    %v581 = vmax.f32 %v576, 0.0
    %582 = vset.pattern.permute.xlu0 1
    %583 = vperm.xlu0 %582, %v524
    %v584 = vpop.permute.xlu0 %583
    %v586 = vadd.f32 %v580, %v584
    %v587 = vadd.f32 %v581, %v584
    %v588 = vadd.f32 %v586, %v280
    %v589 = vadd.f32 %v587, %v281
    %590 = vrot.lane.b32.xlu0 %v588, 2
    %v591 = vpop.permute.xlu0 %590
    %592 = vrot.lane.b32.xlu0 %v589, 2
    %v593 = vpop.permute.xlu0 %592
    %v594 = vsel %vm325, %v591, %v593
    %v595 = vsel %vm325, %v593, %v591
    %v596 = vsel %vm317, %v595, 0.0
    %v597 = vsel %vm318, %v594, 0.0
    %598 = vrot.lane.b32.xlu0 %v588, 126
    %v599 = vpop.permute.xlu0 %598
    %600 = vrot.lane.b32.xlu0 %v589, 126
    %v601 = vpop.permute.xlu0 %600
    %v602 = vsel %vm334, %v599, %v601
    %v603 = vsel %vm334, %v601, %v599
    %v604 = vsel %vm319, %v602, 0.0
    %v605 = vsel %vm320, %v603, 0.0
    %v606 = vpack.c.bf16 %v588, %v596
    %v607 = vpack.c.bf16 %v589, %v597
    %v608 = vpack.c.bf16 %v604, %v604
    %v609 = vpack.c.bf16 %v605, %v605
    %s610 = scalar_lea.vmem %s2, 12
    %v611 = vld [vmem:[%s610] sm:$0xf]
    %s612 = scalar_lea.vmem %s7, 24
    %v613 = vld [vmem:[%s612] sm:$0xff]
    %615 = vset.pattern.permute.xlu0 0
    %616 = vperm.xlu0 %615, %v613
    %v617 = vpop.permute.xlu0 %616
    %v620 = vsel %vm350, %v611, 0
    %v623 = vsel %vm354, %v608, 0
    %v626 = vsel %vm354, %v609, 0
    %628 = vmatprep.subr.bf16.mxu0 %v607
    %629 = vmatpush1.bf16.msra.mxu0 %v606
    %630 = vmatprep.subr.bf16.mxu0 %v626
    %631 = vmatpush1.bf16.msra.mxu0 %v623
    %632 = vmatprep.subr.bf16.mxu0 0
    %633 = vmatpush1.bf16.msra.mxu0 0
    %634 = vmatprep.subr.bf16.mxu0 0
    %635 = vmatpush1.bf16.msra.mxu0 0
    %636 = vmatprep.subr.bf16.mxu0 0
    %637 = vmatpush1.bf16.msra.mxu0 0
    %638 = vmatprep.subr.bf16.mxu0 0
    %639 = vmatpush1.bf16.msra.mxu0 0
    %640 = vmatprep.subr.bf16.mxu0 0
    %641 = vmatpush1.bf16.msra.mxu0 0
    %642 = vmatprep.subr.bf16.mxu0 0
    %643 = vmatpush1.bf16.msra.mxu0 0
    %644 = vmatprep.subr.bf16.mxu0 0
    %645 = vmatpush1.bf16.msra.mxu0 0
    %646 = vmatprep.subr.bf16.mxu0 0
    %647 = vmatpush1.bf16.msra.mxu0 0
    %648 = vmatprep.subr.bf16.mxu0 0
    %649 = vmatpush1.bf16.msra.mxu0 0
    %650 = vmatprep.subr.bf16.mxu0 0
    %651 = vmatpush1.bf16.msra.mxu0 0
    %652 = vmatprep.subr.bf16.mxu0 0
    %653 = vmatpush1.bf16.msra.mxu0 0
    %654 = vmatprep.subr.bf16.mxu0 0
    %655 = vmatpush1.bf16.msra.mxu0 0
    %656 = vmatprep.subr.bf16.mxu0 0
    %657 = vmatpush1.bf16.msra.mxu0 0
    %658 = vmatprep.subr.bf16.mxu0 0
    %659 = vmatpush1.bf16.msra.mxu0 0
    %660 = vmatprep.mubr.bf16.mxu0 0
    %661 = vmatmul.mubr.bf16.gmra.mrb[0].mxu0 %v620
    %v662 = vpop.f32.mrb[0].mxu0
    %v663 = vadd.f32 %v617, %v662
    %v664 = vpop.f32.mrb[0].mxu0
    %v665 = vadd.f32 %v617, %v664
    %v666 = vpop.f32.mrb[0].mxu0
    %v667 = vpop.f32.mrb[0].mxu0
    %668 = vdwg.mxu0
    %v669 = vmax.f32 %v663, 0.0
    %v670 = vmax.f32 %v665, 0.0
    %671 = vset.pattern.permute.xlu0 1
    %672 = vperm.xlu0 %671, %v613
    %v673 = vpop.permute.xlu0 %672
    %v675 = vadd.f32 %v669, %v673
    %v676 = vadd.f32 %v670, %v673
    %v677 = vadd.f32 %v675, %v282
    %v678 = vadd.f32 %v676, %v283
    %679 = vrot.lane.b32.xlu0 %v677, 2
    %v680 = vpop.permute.xlu0 %679
    %681 = vrot.lane.b32.xlu0 %v678, 2
    %v682 = vpop.permute.xlu0 %681
    %v683 = vsel %vm325, %v680, %v682
    %v684 = vsel %vm325, %v682, %v680
    %v685 = vsel %vm317, %v684, 0.0
    %v686 = vsel %vm318, %v683, 0.0
    %687 = vrot.lane.b32.xlu0 %v677, 126
    %v688 = vpop.permute.xlu0 %687
    %689 = vrot.lane.b32.xlu0 %v678, 126
    %v690 = vpop.permute.xlu0 %689
    %v691 = vsel %vm334, %v688, %v690
    %v692 = vsel %vm334, %v690, %v688
    %v693 = vsel %vm319, %v691, 0.0
    %v694 = vsel %vm320, %v692, 0.0
    %v695 = vpack.c.bf16 %v677, %v685
    %v696 = vpack.c.bf16 %v678, %v686
    %v697 = vpack.c.bf16 %v693, %v693
    %v698 = vpack.c.bf16 %v694, %v694
    %s699 = scalar_lea.vmem %s2, 16
    %v700 = vld [vmem:[%s699] sm:$0xf]
    %s701 = scalar_lea.vmem %s7, 32
    %v702 = vld [vmem:[%s701] sm:$0xff]
    %704 = vset.pattern.permute.xlu0 0
    %705 = vperm.xlu0 %704, %v702
    %v706 = vpop.permute.xlu0 %705
    %v709 = vsel %vm350, %v700, 0
    %v712 = vsel %vm354, %v697, 0
    %v715 = vsel %vm354, %v698, 0
    %717 = vmatprep.subr.bf16.mxu0 %v696
    %718 = vmatpush1.bf16.msra.mxu0 %v695
    %719 = vmatprep.subr.bf16.mxu0 %v715
    %720 = vmatpush1.bf16.msra.mxu0 %v712
    %721 = vmatprep.subr.bf16.mxu0 0
    %722 = vmatpush1.bf16.msra.mxu0 0
    %723 = vmatprep.subr.bf16.mxu0 0
    %724 = vmatpush1.bf16.msra.mxu0 0
    %725 = vmatprep.subr.bf16.mxu0 0
    %726 = vmatpush1.bf16.msra.mxu0 0
    %727 = vmatprep.subr.bf16.mxu0 0
    %728 = vmatpush1.bf16.msra.mxu0 0
    %729 = vmatprep.subr.bf16.mxu0 0
    %730 = vmatpush1.bf16.msra.mxu0 0
    %731 = vmatprep.subr.bf16.mxu0 0
    %732 = vmatpush1.bf16.msra.mxu0 0
    %733 = vmatprep.subr.bf16.mxu0 0
    %734 = vmatpush1.bf16.msra.mxu0 0
    %735 = vmatprep.subr.bf16.mxu0 0
    %736 = vmatpush1.bf16.msra.mxu0 0
    %737 = vmatprep.subr.bf16.mxu0 0
    %738 = vmatpush1.bf16.msra.mxu0 0
    %739 = vmatprep.subr.bf16.mxu0 0
    %740 = vmatpush1.bf16.msra.mxu0 0
    %741 = vmatprep.subr.bf16.mxu0 0
    %742 = vmatpush1.bf16.msra.mxu0 0
    %743 = vmatprep.subr.bf16.mxu0 0
    %744 = vmatpush1.bf16.msra.mxu0 0
    %745 = vmatprep.subr.bf16.mxu0 0
    %746 = vmatpush1.bf16.msra.mxu0 0
    %747 = vmatprep.subr.bf16.mxu0 0
    %748 = vmatpush1.bf16.msra.mxu0 0
    %749 = vmatprep.mubr.bf16.mxu0 0
    %750 = vmatmul.mubr.bf16.gmra.mrb[0].mxu0 %v709
    %v751 = vpop.f32.mrb[0].mxu0
    %v752 = vadd.f32 %v706, %v751
    %v753 = vpop.f32.mrb[0].mxu0
    %v754 = vadd.f32 %v706, %v753
    %v755 = vpop.f32.mrb[0].mxu0
    %v756 = vpop.f32.mrb[0].mxu0
    %757 = vdwg.mxu0
    %v758 = vmax.f32 %v752, 0.0
    %v759 = vmax.f32 %v754, 0.0
    %760 = vset.pattern.permute.xlu0 1
    %761 = vperm.xlu0 %760, %v702
    %v762 = vpop.permute.xlu0 %761
    %v764 = vadd.f32 %v758, %v762
    %v765 = vadd.f32 %v759, %v762
    %v766 = vadd.f32 %v764, %v284
    %v767 = vadd.f32 %v765, %v285
    %768 = vrot.lane.b32.xlu0 %v766, 2
    %v769 = vpop.permute.xlu0 %768
    %770 = vrot.lane.b32.xlu0 %v767, 2
    %v771 = vpop.permute.xlu0 %770
    %v772 = vsel %vm325, %v769, %v771
    %v773 = vsel %vm325, %v771, %v769
    %v774 = vsel %vm317, %v773, 0.0
    %v775 = vsel %vm318, %v772, 0.0
    %776 = vrot.lane.b32.xlu0 %v766, 126
    %v777 = vpop.permute.xlu0 %776
    %778 = vrot.lane.b32.xlu0 %v767, 126
    %v779 = vpop.permute.xlu0 %778
    %v780 = vsel %vm334, %v777, %v779
    %v781 = vsel %vm334, %v779, %v777
    %v782 = vsel %vm319, %v780, 0.0
    %v783 = vsel %vm320, %v781, 0.0
    %v784 = vpack.c.bf16 %v766, %v774
    %v785 = vpack.c.bf16 %v767, %v775
    %v786 = vpack.c.bf16 %v782, %v782
    %v787 = vpack.c.bf16 %v783, %v783
    %s788 = scalar_lea.vmem %s2, 20
    %v789 = vld [vmem:[%s788] sm:$0xf]
    %s790 = scalar_lea.vmem %s7, 40
    %v791 = vld [vmem:[%s790] sm:$0xff]
    %793 = vset.pattern.permute.xlu0 0
    %794 = vperm.xlu0 %793, %v791
    %v795 = vpop.permute.xlu0 %794
    %v798 = vsel %vm350, %v789, 0
    %v801 = vsel %vm354, %v786, 0
    %v804 = vsel %vm354, %v787, 0
    %806 = vmatprep.subr.bf16.mxu0 %v785
    %807 = vmatpush1.bf16.msra.mxu0 %v784
    %808 = vmatprep.subr.bf16.mxu0 %v804
    %809 = vmatpush1.bf16.msra.mxu0 %v801
    %810 = vmatprep.subr.bf16.mxu0 0
    %811 = vmatpush1.bf16.msra.mxu0 0
    %812 = vmatprep.subr.bf16.mxu0 0
    %813 = vmatpush1.bf16.msra.mxu0 0
    %814 = vmatprep.subr.bf16.mxu0 0
    %815 = vmatpush1.bf16.msra.mxu0 0
    %816 = vmatprep.subr.bf16.mxu0 0
    %817 = vmatpush1.bf16.msra.mxu0 0
    %818 = vmatprep.subr.bf16.mxu0 0
    %819 = vmatpush1.bf16.msra.mxu0 0
    %820 = vmatprep.subr.bf16.mxu0 0
    %821 = vmatpush1.bf16.msra.mxu0 0
    %822 = vmatprep.subr.bf16.mxu0 0
    %823 = vmatpush1.bf16.msra.mxu0 0
    %824 = vmatprep.subr.bf16.mxu0 0
    %825 = vmatpush1.bf16.msra.mxu0 0
    %826 = vmatprep.subr.bf16.mxu0 0
    %827 = vmatpush1.bf16.msra.mxu0 0
    %828 = vmatprep.subr.bf16.mxu0 0
    %829 = vmatpush1.bf16.msra.mxu0 0
    %830 = vmatprep.subr.bf16.mxu0 0
    %831 = vmatpush1.bf16.msra.mxu0 0
    %832 = vmatprep.subr.bf16.mxu0 0
    %833 = vmatpush1.bf16.msra.mxu0 0
    %834 = vmatprep.subr.bf16.mxu0 0
    %835 = vmatpush1.bf16.msra.mxu0 0
    %836 = vmatprep.subr.bf16.mxu0 0
    %837 = vmatpush1.bf16.msra.mxu0 0
    %838 = vmatprep.mubr.bf16.mxu0 0
    %839 = vmatmul.mubr.bf16.gmra.mrb[0].mxu0 %v798
    %v840 = vpop.f32.mrb[0].mxu0
    %v841 = vadd.f32 %v795, %v840
    %v842 = vpop.f32.mrb[0].mxu0
    %v843 = vadd.f32 %v795, %v842
    %v844 = vpop.f32.mrb[0].mxu0
    %v845 = vpop.f32.mrb[0].mxu0
    %846 = vdwg.mxu0
    %v847 = vmax.f32 %v841, 0.0
    %v848 = vmax.f32 %v843, 0.0
    %849 = vset.pattern.permute.xlu0 1
    %850 = vperm.xlu0 %849, %v791
    %v851 = vpop.permute.xlu0 %850
    %v853 = vadd.f32 %v847, %v851
    %v854 = vadd.f32 %v848, %v851
    %v855 = vadd.f32 %v853, %v286
    %v856 = vadd.f32 %v854, %v287
    %857 = vrot.lane.b32.xlu0 %v855, 2
    %v858 = vpop.permute.xlu0 %857
    %859 = vrot.lane.b32.xlu0 %v856, 2
    %v860 = vpop.permute.xlu0 %859
    %v861 = vsel %vm325, %v858, %v860
    %v862 = vsel %vm325, %v860, %v858
    %v863 = vsel %vm317, %v862, 0.0
    %v864 = vsel %vm318, %v861, 0.0
    %865 = vrot.lane.b32.xlu0 %v855, 126
    %v866 = vpop.permute.xlu0 %865
    %867 = vrot.lane.b32.xlu0 %v856, 126
    %v868 = vpop.permute.xlu0 %867
    %v869 = vsel %vm334, %v866, %v868
    %v870 = vsel %vm334, %v868, %v866
    %v871 = vsel %vm319, %v869, 0.0
    %v872 = vsel %vm320, %v870, 0.0
    %v873 = vpack.c.bf16 %v855, %v863
    %v874 = vpack.c.bf16 %v856, %v864
    %v875 = vpack.c.bf16 %v871, %v871
    %v876 = vpack.c.bf16 %v872, %v872
    %s877 = scalar_lea.vmem %s2, 24
    %v878 = vld [vmem:[%s877] sm:$0xf]
    %s879 = scalar_lea.vmem %s7, 48
    %v880 = vld [vmem:[%s879] sm:$0xff]
    %882 = vset.pattern.permute.xlu0 0
    %883 = vperm.xlu0 %882, %v880
    %v884 = vpop.permute.xlu0 %883
    %v887 = vsel %vm350, %v878, 0
    %v890 = vsel %vm354, %v875, 0
    %v893 = vsel %vm354, %v876, 0
    %895 = vmatprep.subr.bf16.mxu0 %v874
    %896 = vmatpush1.bf16.msra.mxu0 %v873
    %897 = vmatprep.subr.bf16.mxu0 %v893
    %898 = vmatpush1.bf16.msra.mxu0 %v890
    %899 = vmatprep.subr.bf16.mxu0 0
    %900 = vmatpush1.bf16.msra.mxu0 0
    %901 = vmatprep.subr.bf16.mxu0 0
    %902 = vmatpush1.bf16.msra.mxu0 0
    %903 = vmatprep.subr.bf16.mxu0 0
    %904 = vmatpush1.bf16.msra.mxu0 0
    %905 = vmatprep.subr.bf16.mxu0 0
    %906 = vmatpush1.bf16.msra.mxu0 0
    %907 = vmatprep.subr.bf16.mxu0 0
    %908 = vmatpush1.bf16.msra.mxu0 0
    %909 = vmatprep.subr.bf16.mxu0 0
    %910 = vmatpush1.bf16.msra.mxu0 0
    %911 = vmatprep.subr.bf16.mxu0 0
    %912 = vmatpush1.bf16.msra.mxu0 0
    %913 = vmatprep.subr.bf16.mxu0 0
    %914 = vmatpush1.bf16.msra.mxu0 0
    %915 = vmatprep.subr.bf16.mxu0 0
    %916 = vmatpush1.bf16.msra.mxu0 0
    %917 = vmatprep.subr.bf16.mxu0 0
    %918 = vmatpush1.bf16.msra.mxu0 0
    %919 = vmatprep.subr.bf16.mxu0 0
    %920 = vmatpush1.bf16.msra.mxu0 0
    %921 = vmatprep.subr.bf16.mxu0 0
    %922 = vmatpush1.bf16.msra.mxu0 0
    %923 = vmatprep.subr.bf16.mxu0 0
    %924 = vmatpush1.bf16.msra.mxu0 0
    %925 = vmatprep.subr.bf16.mxu0 0
    %926 = vmatpush1.bf16.msra.mxu0 0
    %927 = vmatprep.mubr.bf16.mxu0 0
    %928 = vmatmul.mubr.bf16.gmra.mrb[0].mxu0 %v887
    %v929 = vpop.f32.mrb[0].mxu0
    %v930 = vadd.f32 %v884, %v929
    %v931 = vpop.f32.mrb[0].mxu0
    %v932 = vadd.f32 %v884, %v931
    %v933 = vpop.f32.mrb[0].mxu0
    %v934 = vpop.f32.mrb[0].mxu0
    %935 = vdwg.mxu0
    %v936 = vmax.f32 %v930, 0.0
    %v937 = vmax.f32 %v932, 0.0
    %938 = vset.pattern.permute.xlu0 1
    %939 = vperm.xlu0 %938, %v880
    %v940 = vpop.permute.xlu0 %939
    %v942 = vadd.f32 %v936, %v940
    %v943 = vadd.f32 %v937, %v940
    %v944 = vpack.c.bf16 %v497, %v408
    %v945 = vpack.c.bf16 %v498, %v409
    %v946 = vpack.c.bf16 %v675, %v586
    %v947 = vpack.c.bf16 %v676, %v587
    %v948 = vpack.c.bf16 %v853, %v764
    %v949 = vpack.c.bf16 %v854, %v765
    %v950 = vpack.c.bf16 %v288, %v942
    %v951 = vpack.c.bf16 %v289, %v943
    %v952 = vld [vmem:[%s3] sm:$0xf]
    %v953 = vld [vmem:[%s3 + $0x4] sm:$0xf]
    %v954 = vld [vmem:[%s3 + $0x8] sm:$0xf]
    %v955 = vld [vmem:[%s3 + $0xc] sm:$0xf]
    %v956 = vld [vmem:[%s3 + $0x10] sm:$0xf]
    %v957 = vld [vmem:[%s3 + $0x14] sm:$0xf]
    %v958 = vld [vmem:[%s3 + $0x18] sm:$0xf]
    %v959 = vld [vmem:[%s3 + $0x1c] sm:$0xf]
    %960 = vset.pattern.permute.xlu0 2
    %961 = vperm.xlu0 %960, %v64
    %v962 = vpop.permute.xlu0 %961
    %964 = vset.pattern.permute.xlu0 2
    %965 = vperm.xlu0 %964, %v65
    %v966 = vpop.permute.xlu0 %965
    %968 = vset.pattern.permute.xlu0 2
    %969 = vperm.xlu0 %968, %v66
    %v970 = vpop.permute.xlu0 %969
    %972 = vset.pattern.permute.xlu0 2
    %973 = vperm.xlu0 %972, %v67
    %v974 = vpop.permute.xlu0 %973
    %976 = vset.pattern.permute.xlu0 2
    %977 = vperm.xlu0 %976, %v68
    %v978 = vpop.permute.xlu0 %977
    %980 = vset.pattern.permute.xlu0 2
    %981 = vperm.xlu0 %980, %v69
    %v982 = vpop.permute.xlu0 %981
    %984 = vset.pattern.permute.xlu0 2
    %985 = vperm.xlu0 %984, %v70
    %v986 = vpop.permute.xlu0 %985
    %988 = vset.pattern.permute.xlu0 2
    %989 = vperm.xlu0 %988, %v71
    %v990 = vpop.permute.xlu0 %989
    %v1000 = vunpack.c.l.b16 %v952
    %v1001 = vunpack.c.l.b16 %v953
    %v1002 = vunpack.c.l.b16 %v954
    %v1003 = vunpack.c.l.b16 %v955
    %v1004 = vunpack.c.l.b16 %v956
    %v1005 = vunpack.c.l.b16 %v957
    %v1006 = vunpack.c.l.b16 %v958
    %v1007 = vunpack.c.l.b16 %v959
    %v1008 = vpack.c.b16 %v1001, %v1000
    %v1009 = vpack.c.b16 %v1003, %v1002
    %v1010 = vpack.c.b16 %v1005, %v1004
    %v1011 = vpack.c.b16 %v1007, %v1006
    %v1013 = vsel %vm140, %v1008, 0
    %v1016 = vsel %vm140, %v1009, 0
    %v1019 = vsel %vm140, %v1010, 0
    %v1022 = vsel %vm140, %v1011, 0
    %1024 = vmatprep.subr.bf16.mxu0 %v945
    %1025 = vmatpush1.bf16.msra.mxu0 %v944
    %1026 = vmatprep.subr.bf16.mxu0 %v947
    %1027 = vmatpush1.bf16.msra.mxu0 %v946
    %1028 = vmatprep.subr.bf16.mxu0 %v949
    %1029 = vmatpush1.bf16.msra.mxu0 %v948
    %1030 = vmatprep.subr.bf16.mxu0 %v951
    %1031 = vmatpush1.bf16.msra.mxu0 %v950
    %1032 = vmatprep.subr.bf16.mxu0 0
    %1033 = vmatpush1.bf16.msra.mxu0 0
    %1034 = vmatprep.subr.bf16.mxu0 0
    %1035 = vmatpush1.bf16.msra.mxu0 0
    %1036 = vmatprep.subr.bf16.mxu0 0
    %1037 = vmatpush1.bf16.msra.mxu0 0
    %1038 = vmatprep.subr.bf16.mxu0 0
    %1039 = vmatpush1.bf16.msra.mxu0 0
    %1040 = vmatprep.subr.bf16.mxu0 0
    %1041 = vmatpush1.bf16.msra.mxu0 0
    %1042 = vmatprep.subr.bf16.mxu0 0
    %1043 = vmatpush1.bf16.msra.mxu0 0
    %1044 = vmatprep.subr.bf16.mxu0 0
    %1045 = vmatpush1.bf16.msra.mxu0 0
    %1046 = vmatprep.subr.bf16.mxu0 0
    %1047 = vmatpush1.bf16.msra.mxu0 0
    %1048 = vmatprep.subr.bf16.mxu0 0
    %1049 = vmatpush1.bf16.msra.mxu0 0
    %1050 = vmatprep.subr.bf16.mxu0 0
    %1051 = vmatpush1.bf16.msra.mxu0 0
    %1052 = vmatprep.subr.bf16.mxu0 0
    %1053 = vmatpush1.bf16.msra.mxu0 0
    %1054 = vmatprep.subr.bf16.mxu0 0
    %1055 = vmatpush1.bf16.msra.mxu0 0
    %1056 = vmatprep.mubr.bf16.mxu0 0
    %1057 = vmatmul.mubr.bf16.gmra.mrb[0].mxu0 %v1013
    %v1058 = vpop.f32.mrb[0].mxu0
    %v1059 = vadd.f32 %v962, %v1058
    %v1060 = vpop.f32.mrb[0].mxu0
    %v1061 = vadd.f32 %v962, %v1060
    %v1062 = vpop.f32.mrb[0].mxu0
    %v1063 = vadd.f32 %v966, %v1062
    %v1064 = vpop.f32.mrb[0].mxu0
    %v1065 = vadd.f32 %v966, %v1064
    %1066 = vmatprep.mubr.bf16.mxu0 0
    %1067 = vmatmul.mubr.bf16.gmra.mrb[0].mxu0 %v1016
    %v1068 = vpop.f32.mrb[0].mxu0
    %v1069 = vadd.f32 %v970, %v1068
    %v1070 = vpop.f32.mrb[0].mxu0
    %v1071 = vadd.f32 %v970, %v1070
    %v1072 = vpop.f32.mrb[0].mxu0
    %v1073 = vadd.f32 %v974, %v1072
    %v1074 = vpop.f32.mrb[0].mxu0
    %v1075 = vadd.f32 %v974, %v1074
    %1076 = vmatprep.mubr.bf16.mxu0 0
    %1077 = vmatmul.mubr.bf16.gmra.mrb[0].mxu0 %v1019
    %v1078 = vpop.f32.mrb[0].mxu0
    %v1079 = vadd.f32 %v978, %v1078
    %v1080 = vpop.f32.mrb[0].mxu0
    %v1081 = vadd.f32 %v978, %v1080
    %v1082 = vpop.f32.mrb[0].mxu0
    %v1083 = vadd.f32 %v982, %v1082
    %v1084 = vpop.f32.mrb[0].mxu0
    %v1085 = vadd.f32 %v982, %v1084
    %1086 = vmatprep.mubr.bf16.mxu0 0
    %1087 = vmatmul.mubr.bf16.gmra.mrb[0].mxu0 %v1022
    %v1088 = vpop.f32.mrb[0].mxu0
    %v1089 = vadd.f32 %v986, %v1088
    %v1090 = vpop.f32.mrb[0].mxu0
    %v1091 = vadd.f32 %v986, %v1090
    %v1092 = vpop.f32.mrb[0].mxu0
    %v1093 = vadd.f32 %v990, %v1092
    %v1094 = vpop.f32.mrb[0].mxu0
    %v1095 = vadd.f32 %v990, %v1094
    %1096 = vdwg.mxu0
    %v1097 = vmax.f32 %v1059, 0.0
    %v1098 = vmax.f32 %v1061, 0.0
    %v1099 = vmax.f32 %v1063, 0.0
    %v1100 = vmax.f32 %v1065, 0.0
    %v1101 = vmax.f32 %v1069, 0.0
    %v1102 = vmax.f32 %v1071, 0.0
    %v1103 = vmax.f32 %v1073, 0.0
    %v1104 = vmax.f32 %v1075, 0.0
    %v1105 = vmax.f32 %v1079, 0.0
    %v1106 = vmax.f32 %v1081, 0.0
    %v1107 = vmax.f32 %v1083, 0.0
    %v1108 = vmax.f32 %v1085, 0.0
    %v1109 = vmax.f32 %v1089, 0.0
    %v1110 = vmax.f32 %v1091, 0.0
    %v1111 = vmax.f32 %v1093, 0.0
    %v1112 = vmax.f32 %v1095, 0.0
    %1113 = vset.pattern.permute.xlu0 3
    %1114 = vperm.xlu0 %1113, %v64
    %v1115 = vpop.permute.xlu0 %1114
    %1117 = vset.pattern.permute.xlu0 3
    %1118 = vperm.xlu0 %1117, %v65
    %v1119 = vpop.permute.xlu0 %1118
    %1121 = vset.pattern.permute.xlu0 3
    %1122 = vperm.xlu0 %1121, %v66
    %v1123 = vpop.permute.xlu0 %1122
    %1125 = vset.pattern.permute.xlu0 3
    %1126 = vperm.xlu0 %1125, %v67
    %v1127 = vpop.permute.xlu0 %1126
    %1129 = vset.pattern.permute.xlu0 3
    %1130 = vperm.xlu0 %1129, %v68
    %v1131 = vpop.permute.xlu0 %1130
    %1133 = vset.pattern.permute.xlu0 3
    %1134 = vperm.xlu0 %1133, %v69
    %v1135 = vpop.permute.xlu0 %1134
    %1137 = vset.pattern.permute.xlu0 3
    %1138 = vperm.xlu0 %1137, %v70
    %v1139 = vpop.permute.xlu0 %1138
    %1141 = vset.pattern.permute.xlu0 3
    %1142 = vperm.xlu0 %1141, %v71
    %v1143 = vpop.permute.xlu0 %1142
    %v1145 = vadd.f32 %v1097, %v1115
    %v1146 = vadd.f32 %v1098, %v1115
    %v1147 = vadd.f32 %v1099, %v1119
    %v1148 = vadd.f32 %v1100, %v1119
    %v1149 = vadd.f32 %v1101, %v1123
    %v1150 = vadd.f32 %v1102, %v1123
    %v1151 = vadd.f32 %v1103, %v1127
    %v1152 = vadd.f32 %v1104, %v1127
    %v1153 = vadd.f32 %v1105, %v1131
    %v1154 = vadd.f32 %v1106, %v1131
    %v1155 = vadd.f32 %v1107, %v1135
    %v1156 = vadd.f32 %v1108, %v1135
    %v1157 = vadd.f32 %v1109, %v1139
    %v1158 = vadd.f32 %v1110, %v1139
    %v1159 = vadd.f32 %v1111, %v1143
    %v1160 = vadd.f32 %v1112, %v1143
    %v1161 = vld [vmem:[%s9] sm:$0xff]
    %v1162 = vld [vmem:[%s9 + $0x8] sm:$0xff]
    %v1163 = vld [vmem:[%s9 + $0x10] sm:$0xff]
    %v1164 = vld [vmem:[%s9 + $0x18] sm:$0xff]
    %v1165 = vld [vmem:[%s9 + $0x20] sm:$0xff]
    %v1166 = vld [vmem:[%s9 + $0x28] sm:$0xff]
    %v1167 = vld [vmem:[%s9 + $0x30] sm:$0xff]
    %v1168 = vld [vmem:[%s9 + $0x38] sm:$0xff]
    %v1169 = vld [vmem:[%s9 + $0x40] sm:$0xff]
    %v1170 = vld [vmem:[%s9 + $0x48] sm:$0xff]
    %v1171 = vld [vmem:[%s9 + $0x50] sm:$0xff]
    %v1172 = vld [vmem:[%s9 + $0x58] sm:$0xff]
    %v1173 = vld [vmem:[%s9 + $0x60] sm:$0xff]
    %v1174 = vld [vmem:[%s9 + $0x68] sm:$0xff]
    %v1175 = vld [vmem:[%s9 + $0x70] sm:$0xff]
    %v1176 = vld [vmem:[%s9 + $0x78] sm:$0xff]
    %v1177 = vld [vmem:[%s9 + $0x80] sm:$0xff]
    %v1178 = vld [vmem:[%s9 + $0x88] sm:$0xff]
    %v1179 = vld [vmem:[%s9 + $0x90] sm:$0xff]
    %v1180 = vld [vmem:[%s9 + $0x98] sm:$0xff]
    %v1181 = vld [vmem:[%s9 + $0xa0] sm:$0xff]
    %v1182 = vld [vmem:[%s9 + $0xa8] sm:$0xff]
    %v1183 = vld [vmem:[%s9 + $0xb0] sm:$0xff]
    %v1184 = vld [vmem:[%s9 + $0xb8] sm:$0xff]
    %v1185 = vld [vmem:[%s9 + $0xc0] sm:$0xff]
    %v1186 = vld [vmem:[%s9 + $0xc8] sm:$0xff]
    %v1187 = vld [vmem:[%s9 + $0xd0] sm:$0xff]
    %v1188 = vld [vmem:[%s9 + $0xd8] sm:$0xff]
    %v1189 = vld [vmem:[%s9 + $0xe0] sm:$0xff]
    %v1190 = vld [vmem:[%s9 + $0xe8] sm:$0xff]
    %v1191 = vld [vmem:[%s9 + $0xf0] sm:$0xff]
    %v1192 = vld [vmem:[%s9 + $0xf8] sm:$0xff]
    %1193 = vmatprep.subr.mxu0 0.0
    %1194 = vmatpush1.msra.mxu0 %v1161
    %1195 = vmatprep.subr.mxu0 0.0
    %1196 = vmatpush1.msra.mxu0 %v1162
    %1197 = vmatprep.subr.mxu0 0.0
    %1198 = vmatpush1.msra.mxu0 %v1163
    %1199 = vmatprep.subr.mxu0 0.0
    %1200 = vmatpush1.msra.mxu0 %v1164
    %1201 = vmatprep.subr.mxu0 0.0
    %1202 = vmatpush1.msra.mxu0 %v1165
    %1203 = vmatprep.subr.mxu0 0.0
    %1204 = vmatpush1.msra.mxu0 %v1166
    %1205 = vmatprep.subr.mxu0 0.0
    %1206 = vmatpush1.msra.mxu0 %v1167
    %1207 = vmatprep.subr.mxu0 0.0
    %1208 = vmatpush1.msra.mxu0 %v1168
    %1209 = vmatprep.subr.mxu0 0.0
    %1210 = vmatpush1.msra.mxu0 %v1169
    %1211 = vmatprep.subr.mxu0 0.0
    %1212 = vmatpush1.msra.mxu0 %v1170
    %1213 = vmatprep.subr.mxu0 0.0
    %1214 = vmatpush1.msra.mxu0 %v1171
    %1215 = vmatprep.subr.mxu0 0.0
    %1216 = vmatpush1.msra.mxu0 %v1172
    %1217 = vmatprep.subr.mxu0 0.0
    %1218 = vmatpush1.msra.mxu0 %v1173
    %1219 = vmatprep.subr.mxu0 0.0
    %1220 = vmatpush1.msra.mxu0 %v1174
    %1221 = vmatprep.subr.mxu0 0.0
    %1222 = vmatpush1.msra.mxu0 %v1175
    %1223 = vmatprep.subr.mxu0 0.0
    %1224 = vmatpush1.msra.mxu0 %v1176
    %1225 = vmatprep.subr.mxu0 0.0
    %1226 = vmatpush1.msra.mxu0 %v1177
    %1227 = vmatprep.subr.mxu0 0.0
    %1228 = vmatpush1.msra.mxu0 %v1178
    %1229 = vmatprep.subr.mxu0 0.0
    %1230 = vmatpush1.msra.mxu0 %v1179
    %1231 = vmatprep.subr.mxu0 0.0
    %1232 = vmatpush1.msra.mxu0 %v1180
    %1233 = vmatprep.subr.mxu0 0.0
    %1234 = vmatpush1.msra.mxu0 %v1181
    %1235 = vmatprep.subr.mxu0 0.0
    %1236 = vmatpush1.msra.mxu0 %v1182
    %1237 = vmatprep.subr.mxu0 0.0
    %1238 = vmatpush1.msra.mxu0 %v1183
    %1239 = vmatprep.subr.mxu0 0.0
    %1240 = vmatpush1.msra.mxu0 %v1184
    %1241 = vmatprep.subr.mxu0 0.0
    %1242 = vmatpush1.msra.mxu0 %v1185
    %1243 = vmatprep.subr.mxu0 0.0
    %1244 = vmatpush1.msra.mxu0 %v1186
    %1245 = vmatprep.subr.mxu0 0.0
    %1246 = vmatpush1.msra.mxu0 %v1187
    %1247 = vmatprep.subr.mxu0 0.0
    %1248 = vmatpush1.msra.mxu0 %v1188
    %1249 = vmatprep.subr.mxu0 0.0
    %1250 = vmatpush1.msra.mxu0 %v1189
    %1251 = vmatprep.subr.mxu0 0.0
    %1252 = vmatpush1.msra.mxu0 %v1190
    %1253 = vmatprep.subr.mxu0 0.0
    %1254 = vmatpush1.msra.mxu0 %v1191
    %1255 = vmatprep.subr.mxu0 0.0
    %1256 = vmatpush1.msra.mxu0 %v1192
    %1257 = vmatprep.mubr.f32.mxu0 %v1146
    %1258 = vmatmul.mubr.f32.gmra.mrb[0].mxu0 %v1145
    %v1259 = vpop.f32.mrb[0].mxu0
    %v1260 = vadd.f32 0.0, %v1259
    %v1261 = vpop.f32.mrb[0].mxu0
    %1262 = vmatprep.mubr.f32.mxu0 %v1148
    %1263 = vmatmul.mubr.f32.gmra.mrb[0].mxu0 %v1147
    %v1264 = vpop.f32.mrb[0].mxu0
    %v1265 = vadd.f32 0.0, %v1264
    %v1266 = vpop.f32.mrb[0].mxu0
    %1267 = vmatprep.mubr.f32.mxu0 %v1150
    %1268 = vmatmul.mubr.f32.gmra.mrb[0].mxu0 %v1149
    %v1269 = vpop.f32.mrb[0].mxu0
    %v1270 = vadd.f32 0.0, %v1269
    %v1271 = vpop.f32.mrb[0].mxu0
    %1272 = vmatprep.mubr.f32.mxu0 %v1152
    %1273 = vmatmul.mubr.f32.gmra.mrb[0].mxu0 %v1151
    %v1274 = vpop.f32.mrb[0].mxu0
    %v1275 = vadd.f32 0.0, %v1274
    %v1276 = vpop.f32.mrb[0].mxu0
    %1277 = vmatprep.mubr.f32.mxu0 %v1154
    %1278 = vmatmul.mubr.f32.gmra.mrb[0].mxu0 %v1153
    %v1279 = vpop.f32.mrb[0].mxu0
    %v1280 = vadd.f32 0.0, %v1279
    %v1281 = vpop.f32.mrb[0].mxu0
    %1282 = vmatprep.mubr.f32.mxu0 %v1156
    %1283 = vmatmul.mubr.f32.gmra.mrb[0].mxu0 %v1155
    %v1284 = vpop.f32.mrb[0].mxu0
    %v1285 = vadd.f32 0.0, %v1284
    %v1286 = vpop.f32.mrb[0].mxu0
    %1287 = vmatprep.mubr.f32.mxu0 %v1158
    %1288 = vmatmul.mubr.f32.gmra.mrb[0].mxu0 %v1157
    %v1289 = vpop.f32.mrb[0].mxu0
    %v1290 = vadd.f32 0.0, %v1289
    %v1291 = vpop.f32.mrb[0].mxu0
    %1292 = vmatprep.mubr.f32.mxu0 %v1160
    %1293 = vmatmul.mubr.f32.gmra.mrb[0].mxu0 %v1159
    %v1294 = vpop.f32.mrb[0].mxu0
    %v1295 = vadd.f32 0.0, %v1294
    %v1296 = vpop.f32.mrb[0].mxu0
    %1297 = vdwg.mxu0
    %v1298 = vld [vmem:[%s4] sm:$0xf]
    %v1299 = vld [vmem:[%s4 + $0x4] sm:$0xf]
    %v1300 = vld [vmem:[%s4 + $0x8] sm:$0xf]
    %v1301 = vld [vmem:[%s4 + $0xc] sm:$0xf]
    %v1302 = vld [vmem:[%s4 + $0x10] sm:$0xf]
    %v1303 = vld [vmem:[%s4 + $0x14] sm:$0xf]
    %v1304 = vld [vmem:[%s4 + $0x18] sm:$0xf]
    %v1305 = vld [vmem:[%s4 + $0x1c] sm:$0xf]
    %v1306 = vld [vmem:[%s4 + $0x20] sm:$0xf]
    %v1307 = vld [vmem:[%s4 + $0x24] sm:$0xf]
    %v1308 = vld [vmem:[%s4 + $0x28] sm:$0xf]
    %v1309 = vld [vmem:[%s4 + $0x2c] sm:$0xf]
    %v1310 = vld [vmem:[%s4 + $0x30] sm:$0xf]
    %v1311 = vld [vmem:[%s4 + $0x34] sm:$0xf]
    %v1312 = vld [vmem:[%s4 + $0x38] sm:$0xf]
    %v1313 = vld [vmem:[%s4 + $0x3c] sm:$0xf]
    %v1314 = vpack.c.bf16 %v1265, %v1260
    %v1315 = vpack.c.bf16 %v1275, %v1270
    %v1316 = vpack.c.bf16 %v1285, %v1280
    %v1317 = vpack.c.bf16 %v1295, %v1290
    %v1318 = vld [vmem:[%s8] sm:$0xff]
    %v1319 = vld [vmem:[%s8 + $0x8] sm:$0xff]
    %v1320 = vld [vmem:[%s8 + $0x10] sm:$0xff]
    %v1321 = vld [vmem:[%s8 + $0x18] sm:$0xff]
    %v1322 = vld [vmem:[%s8 + $0x20] sm:$0xff]
    %v1323 = vld [vmem:[%s8 + $0x28] sm:$0xff]
    %v1324 = vld [vmem:[%s8 + $0x30] sm:$0xff]
    %v1325 = vld [vmem:[%s8 + $0x38] sm:$0xff]
    %v1326 = vld [vmem:[%s8 + $0x40] sm:$0xff]
    %v1327 = vld [vmem:[%s8 + $0x48] sm:$0xff]
    %v1328 = vld [vmem:[%s8 + $0x50] sm:$0xff]
    %v1329 = vld [vmem:[%s8 + $0x58] sm:$0xff]
    %v1330 = vld [vmem:[%s8 + $0x60] sm:$0xff]
    %v1331 = vld [vmem:[%s8 + $0x68] sm:$0xff]
    %v1332 = vld [vmem:[%s8 + $0x70] sm:$0xff]
    %v1333 = vld [vmem:[%s8 + $0x78] sm:$0xff]
    %1335 = vset.pattern.permute.xlu0 0
    %1336 = vperm.xlu0 %1335, %v1318
    %v1337 = vpop.permute.xlu0 %1336
    %1340 = vset.pattern.permute.xlu0 0
    %1341 = vperm.xlu0 %1340, %v1319
    %v1342 = vpop.permute.xlu0 %1341
    %1345 = vset.pattern.permute.xlu0 0
    %1346 = vperm.xlu0 %1345, %v1320
    %v1347 = vpop.permute.xlu0 %1346
    %1350 = vset.pattern.permute.xlu0 0
    %1351 = vperm.xlu0 %1350, %v1321
    %v1352 = vpop.permute.xlu0 %1351
    %1355 = vset.pattern.permute.xlu0 0
    %1356 = vperm.xlu0 %1355, %v1322
    %v1357 = vpop.permute.xlu0 %1356
    %1360 = vset.pattern.permute.xlu0 0
    %1361 = vperm.xlu0 %1360, %v1323
    %v1362 = vpop.permute.xlu0 %1361
    %1365 = vset.pattern.permute.xlu0 0
    %1366 = vperm.xlu0 %1365, %v1324
    %v1367 = vpop.permute.xlu0 %1366
    %1370 = vset.pattern.permute.xlu0 0
    %1371 = vperm.xlu0 %1370, %v1325
    %v1372 = vpop.permute.xlu0 %1371
    %1375 = vset.pattern.permute.xlu0 0
    %1376 = vperm.xlu0 %1375, %v1326
    %v1377 = vpop.permute.xlu0 %1376
    %1380 = vset.pattern.permute.xlu0 0
    %1381 = vperm.xlu0 %1380, %v1327
    %v1382 = vpop.permute.xlu0 %1381
    %1385 = vset.pattern.permute.xlu0 0
    %1386 = vperm.xlu0 %1385, %v1328
    %v1387 = vpop.permute.xlu0 %1386
    %1390 = vset.pattern.permute.xlu0 0
    %1391 = vperm.xlu0 %1390, %v1329
    %v1392 = vpop.permute.xlu0 %1391
    %1395 = vset.pattern.permute.xlu0 0
    %1396 = vperm.xlu0 %1395, %v1330
    %v1397 = vpop.permute.xlu0 %1396
    %1400 = vset.pattern.permute.xlu0 0
    %1401 = vperm.xlu0 %1400, %v1331
    %v1402 = vpop.permute.xlu0 %1401
    %1405 = vset.pattern.permute.xlu0 0
    %1406 = vperm.xlu0 %1405, %v1332
    %v1407 = vpop.permute.xlu0 %1406
    %1410 = vset.pattern.permute.xlu0 0
    %1411 = vperm.xlu0 %1410, %v1333
    %v1412 = vpop.permute.xlu0 %1411
    %v1430 = vunpack.c.l.b16 %v1298
    %v1431 = vunpack.c.l.b16 %v1299
    %v1432 = vunpack.c.l.b16 %v1300
    %v1433 = vunpack.c.l.b16 %v1301
    %v1434 = vunpack.c.l.b16 %v1302
    %v1435 = vunpack.c.l.b16 %v1303
    %v1436 = vunpack.c.l.b16 %v1304
    %v1437 = vunpack.c.l.b16 %v1305
    %v1438 = vunpack.c.l.b16 %v1306
    %v1439 = vunpack.c.l.b16 %v1307
    %v1440 = vunpack.c.l.b16 %v1308
    %v1441 = vunpack.c.l.b16 %v1309
    %v1442 = vunpack.c.l.b16 %v1310
    %v1443 = vunpack.c.l.b16 %v1311
    %v1444 = vunpack.c.l.b16 %v1312
    %v1445 = vunpack.c.l.b16 %v1313
    %v1446 = vpack.c.b16 %v1431, %v1430
    %v1447 = vpack.c.b16 %v1433, %v1432
    %v1448 = vpack.c.b16 %v1435, %v1434
    %v1449 = vpack.c.b16 %v1437, %v1436
    %v1450 = vpack.c.b16 %v1439, %v1438
    %v1451 = vpack.c.b16 %v1441, %v1440
    %v1452 = vpack.c.b16 %v1443, %v1442
    %v1453 = vpack.c.b16 %v1445, %v1444
    %v1455 = vsel %vm140, %v1446, 0
    %v1458 = vsel %vm140, %v1447, 0
    %v1461 = vsel %vm140, %v1448, 0
    %v1464 = vsel %vm140, %v1449, 0
    %v1467 = vsel %vm140, %v1450, 0
    %v1470 = vsel %vm140, %v1451, 0
    %v1473 = vsel %vm140, %v1452, 0
    %v1476 = vsel %vm140, %v1453, 0
    %1478 = vmatprep.subr.bf16.mxu0 0
    %1479 = vmatpush1.bf16.msra.mxu0 %v1314
    %1480 = vmatprep.subr.bf16.mxu0 0
    %1481 = vmatpush1.bf16.msra.mxu0 %v1315
    %1482 = vmatprep.subr.bf16.mxu0 0
    %1483 = vmatpush1.bf16.msra.mxu0 %v1316
    %1484 = vmatprep.subr.bf16.mxu0 0
    %1485 = vmatpush1.bf16.msra.mxu0 %v1317
    %1486 = vmatprep.subr.bf16.mxu0 0
    %1487 = vmatpush1.bf16.msra.mxu0 0
    %1488 = vmatprep.subr.bf16.mxu0 0
    %1489 = vmatpush1.bf16.msra.mxu0 0
    %1490 = vmatprep.subr.bf16.mxu0 0
    %1491 = vmatpush1.bf16.msra.mxu0 0
    %1492 = vmatprep.subr.bf16.mxu0 0
    %1493 = vmatpush1.bf16.msra.mxu0 0
    %1494 = vmatprep.subr.bf16.mxu0 0
    %1495 = vmatpush1.bf16.msra.mxu0 0
    %1496 = vmatprep.subr.bf16.mxu0 0
    %1497 = vmatpush1.bf16.msra.mxu0 0
    %1498 = vmatprep.subr.bf16.mxu0 0
    %1499 = vmatpush1.bf16.msra.mxu0 0
    %1500 = vmatprep.subr.bf16.mxu0 0
    %1501 = vmatpush1.bf16.msra.mxu0 0
    %1502 = vmatprep.subr.bf16.mxu0 0
    %1503 = vmatpush1.bf16.msra.mxu0 0
    %1504 = vmatprep.subr.bf16.mxu0 0
    %1505 = vmatpush1.bf16.msra.mxu0 0
    %1506 = vmatprep.subr.bf16.mxu0 0
    %1507 = vmatpush1.bf16.msra.mxu0 0
    %1508 = vmatprep.subr.bf16.mxu0 0
    %1509 = vmatpush1.bf16.msra.mxu0 0
    %1510 = vmatprep.mubr.bf16.mxu0 0
    %1511 = vmatmul.mubr.bf16.gmra.mrb[0].mxu0 %v1455
    %v1512 = vpop.f32.mrb[0].mxu0
    %v1513 = vadd.f32 %v1337, %v1512
    %v1514 = vpop.f32.mrb[0].mxu0
    %v1515 = vpop.f32.mrb[0].mxu0
    %v1516 = vadd.f32 %v1342, %v1515
    %v1517 = vpop.f32.mrb[0].mxu0
    %1518 = vmatprep.mubr.bf16.mxu0 0
    %1519 = vmatmul.mubr.bf16.gmra.mrb[0].mxu0 %v1458
    %v1520 = vpop.f32.mrb[0].mxu0
    %v1521 = vadd.f32 %v1347, %v1520
    %v1522 = vpop.f32.mrb[0].mxu0
    %v1523 = vpop.f32.mrb[0].mxu0
    %v1524 = vadd.f32 %v1352, %v1523
    %v1525 = vpop.f32.mrb[0].mxu0
    %1526 = vmatprep.mubr.bf16.mxu0 0
    %1527 = vmatmul.mubr.bf16.gmra.mrb[0].mxu0 %v1461
    %v1528 = vpop.f32.mrb[0].mxu0
    %v1529 = vadd.f32 %v1357, %v1528
    %v1530 = vpop.f32.mrb[0].mxu0
    %v1531 = vpop.f32.mrb[0].mxu0
    %v1532 = vadd.f32 %v1362, %v1531
    %v1533 = vpop.f32.mrb[0].mxu0
    %1534 = vmatprep.mubr.bf16.mxu0 0
    %1535 = vmatmul.mubr.bf16.gmra.mrb[0].mxu0 %v1464
    %v1536 = vpop.f32.mrb[0].mxu0
    %v1537 = vadd.f32 %v1367, %v1536
    %v1538 = vpop.f32.mrb[0].mxu0
    %v1539 = vpop.f32.mrb[0].mxu0
    %v1540 = vadd.f32 %v1372, %v1539
    %v1541 = vpop.f32.mrb[0].mxu0
    %1542 = vmatprep.mubr.bf16.mxu0 0
    %1543 = vmatmul.mubr.bf16.gmra.mrb[0].mxu0 %v1467
    %v1544 = vpop.f32.mrb[0].mxu0
    %v1545 = vadd.f32 %v1377, %v1544
    %v1546 = vpop.f32.mrb[0].mxu0
    %v1547 = vpop.f32.mrb[0].mxu0
    %v1548 = vadd.f32 %v1382, %v1547
    %v1549 = vpop.f32.mrb[0].mxu0
    %1550 = vmatprep.mubr.bf16.mxu0 0
    %1551 = vmatmul.mubr.bf16.gmra.mrb[0].mxu0 %v1470
    %v1552 = vpop.f32.mrb[0].mxu0
    %v1553 = vadd.f32 %v1387, %v1552
    %v1554 = vpop.f32.mrb[0].mxu0
    %v1555 = vpop.f32.mrb[0].mxu0
    %v1556 = vadd.f32 %v1392, %v1555
    %v1557 = vpop.f32.mrb[0].mxu0
    %1558 = vmatprep.mubr.bf16.mxu0 0
    %1559 = vmatmul.mubr.bf16.gmra.mrb[0].mxu0 %v1473
    %v1560 = vpop.f32.mrb[0].mxu0
    %v1561 = vadd.f32 %v1397, %v1560
    %v1562 = vpop.f32.mrb[0].mxu0
    %v1563 = vpop.f32.mrb[0].mxu0
    %v1564 = vadd.f32 %v1402, %v1563
    %v1565 = vpop.f32.mrb[0].mxu0
    %1566 = vmatprep.mubr.bf16.mxu0 0
    %1567 = vmatmul.mubr.bf16.gmra.mrb[0].mxu0 %v1476
    %v1568 = vpop.f32.mrb[0].mxu0
    %v1569 = vadd.f32 %v1407, %v1568
    %v1570 = vpop.f32.mrb[0].mxu0
    %v1571 = vpop.f32.mrb[0].mxu0
    %v1572 = vadd.f32 %v1412, %v1571
    %v1573 = vpop.f32.mrb[0].mxu0
    %1574 = vdwg.mxu0
    %v1575 = vmax.f32 %v1513, 0.0
    %v1576 = vmax.f32 %v1516, 0.0
    %v1577 = vmax.f32 %v1521, 0.0
    %v1578 = vmax.f32 %v1524, 0.0
    %v1579 = vmax.f32 %v1529, 0.0
    %v1580 = vmax.f32 %v1532, 0.0
    %v1581 = vmax.f32 %v1537, 0.0
    %v1582 = vmax.f32 %v1540, 0.0
    %v1583 = vmax.f32 %v1545, 0.0
    %v1584 = vmax.f32 %v1548, 0.0
    %v1585 = vmax.f32 %v1553, 0.0
    %v1586 = vmax.f32 %v1556, 0.0
    %v1587 = vmax.f32 %v1561, 0.0
    %v1588 = vmax.f32 %v1564, 0.0
    %v1589 = vmax.f32 %v1569, 0.0
    %v1590 = vmax.f32 %v1572, 0.0
    %v1591 = vld [vmem:[%s5] sm:$0xf]
    %v1592 = vld [vmem:[%s5 + $0x4] sm:$0xf]
    %v1593 = vld [vmem:[%s5 + $0x8] sm:$0xf]
    %v1594 = vld [vmem:[%s5 + $0xc] sm:$0xf]
    %v1595 = vld [vmem:[%s5 + $0x10] sm:$0xf]
    %v1596 = vld [vmem:[%s5 + $0x14] sm:$0xf]
    %v1597 = vld [vmem:[%s5 + $0x18] sm:$0xf]
    %v1598 = vld [vmem:[%s5 + $0x1c] sm:$0xf]
    %v1599 = vpack.c.bf16 %v1576, %v1575
    %v1600 = vpack.c.bf16 %v1578, %v1577
    %v1601 = vpack.c.bf16 %v1580, %v1579
    %v1602 = vpack.c.bf16 %v1582, %v1581
    %v1603 = vpack.c.bf16 %v1584, %v1583
    %v1604 = vpack.c.bf16 %v1586, %v1585
    %v1605 = vpack.c.bf16 %v1588, %v1587
    %v1606 = vpack.c.bf16 %v1590, %v1589
    %1607 = vset.pattern.permute.xlu0 4
    %1608 = vperm.xlu0 %1607, %v64
    %v1609 = vpop.permute.xlu0 %1608
    %1611 = vset.pattern.permute.xlu0 4
    %1612 = vperm.xlu0 %1611, %v65
    %v1613 = vpop.permute.xlu0 %1612
    %1615 = vset.pattern.permute.xlu0 4
    %1616 = vperm.xlu0 %1615, %v66
    %v1617 = vpop.permute.xlu0 %1616
    %1619 = vset.pattern.permute.xlu0 4
    %1620 = vperm.xlu0 %1619, %v67
    %v1621 = vpop.permute.xlu0 %1620
    %1623 = vset.pattern.permute.xlu0 4
    %1624 = vperm.xlu0 %1623, %v68
    %v1625 = vpop.permute.xlu0 %1624
    %1627 = vset.pattern.permute.xlu0 4
    %1628 = vperm.xlu0 %1627, %v69
    %v1629 = vpop.permute.xlu0 %1628
    %1631 = vset.pattern.permute.xlu0 4
    %1632 = vperm.xlu0 %1631, %v70
    %v1633 = vpop.permute.xlu0 %1632
    %1635 = vset.pattern.permute.xlu0 4
    %1636 = vperm.xlu0 %1635, %v71
    %v1637 = vpop.permute.xlu0 %1636
    %v1647 = vunpack.c.l.b16 %v1591
    %v1648 = vunpack.c.l.b16 %v1592
    %v1649 = vunpack.c.l.b16 %v1593
    %v1650 = vunpack.c.l.b16 %v1594
    %v1651 = vunpack.c.l.b16 %v1595
    %v1652 = vunpack.c.l.b16 %v1596
    %v1653 = vunpack.c.l.b16 %v1597
    %v1654 = vunpack.c.l.b16 %v1598
    %v1655 = vpack.c.b16 %v1648, %v1647
    %v1656 = vpack.c.b16 %v1650, %v1649
    %v1657 = vpack.c.b16 %v1652, %v1651
    %v1658 = vpack.c.b16 %v1654, %v1653
    %1663 = vmatprep.subr.bf16.mxu0 0
    %1664 = vmatpush1.bf16.msra.mxu0 %v1599
    %1665 = vmatprep.subr.bf16.mxu0 0
    %1666 = vmatpush1.bf16.msra.mxu0 %v1600
    %1667 = vmatprep.subr.bf16.mxu0 0
    %1668 = vmatpush1.bf16.msra.mxu0 %v1601
    %1669 = vmatprep.subr.bf16.mxu0 0
    %1670 = vmatpush1.bf16.msra.mxu0 %v1602
    %1671 = vmatprep.subr.bf16.mxu0 0
    %1672 = vmatpush1.bf16.msra.mxu0 %v1603
    %1673 = vmatprep.subr.bf16.mxu0 0
    %1674 = vmatpush1.bf16.msra.mxu0 %v1604
    %1675 = vmatprep.subr.bf16.mxu0 0
    %1676 = vmatpush1.bf16.msra.mxu0 %v1605
    %1677 = vmatprep.subr.bf16.mxu0 0
    %1678 = vmatpush1.bf16.msra.mxu0 %v1606
    %1679 = vmatprep.subr.bf16.mxu0 0
    %1680 = vmatpush1.bf16.msra.mxu0 0
    %1681 = vmatprep.subr.bf16.mxu0 0
    %1682 = vmatpush1.bf16.msra.mxu0 0
    %1683 = vmatprep.subr.bf16.mxu0 0
    %1684 = vmatpush1.bf16.msra.mxu0 0
    %1685 = vmatprep.subr.bf16.mxu0 0
    %1686 = vmatpush1.bf16.msra.mxu0 0
    %1687 = vmatprep.subr.bf16.mxu0 0
    %1688 = vmatpush1.bf16.msra.mxu0 0
    %1689 = vmatprep.subr.bf16.mxu0 0
    %1690 = vmatpush1.bf16.msra.mxu0 0
    %1691 = vmatprep.subr.bf16.mxu0 0
    %1692 = vmatpush1.bf16.msra.mxu0 0
    %1693 = vmatprep.subr.bf16.mxu0 0
    %1694 = vmatpush1.bf16.msra.mxu0 0
    %1695 = vmatprep.mubr.bf16.mxu0 0
    %1696 = vmatmul.mubr.bf16.gmra.mrb[0].mxu0 %v1655
    %v1697 = vpop.f32.mrb[0].mxu0
    %v1698 = vadd.f32 %v1609, %v1697
    %v1699 = vpop.f32.mrb[0].mxu0
    %v1700 = vpop.f32.mrb[0].mxu0
    %v1701 = vadd.f32 %v1613, %v1700
    %v1702 = vpop.f32.mrb[0].mxu0
    %1703 = vmatprep.mubr.bf16.mxu0 0
    %1704 = vmatmul.mubr.bf16.gmra.mrb[0].mxu0 %v1656
    %v1705 = vpop.f32.mrb[0].mxu0
    %v1706 = vadd.f32 %v1617, %v1705
    %v1707 = vpop.f32.mrb[0].mxu0
    %v1708 = vpop.f32.mrb[0].mxu0
    %v1709 = vadd.f32 %v1621, %v1708
    %v1710 = vpop.f32.mrb[0].mxu0
    %1711 = vmatprep.mubr.bf16.mxu0 0
    %1712 = vmatmul.mubr.bf16.gmra.mrb[0].mxu0 %v1657
    %v1713 = vpop.f32.mrb[0].mxu0
    %v1714 = vadd.f32 %v1625, %v1713
    %v1715 = vpop.f32.mrb[0].mxu0
    %v1716 = vpop.f32.mrb[0].mxu0
    %v1717 = vadd.f32 %v1629, %v1716
    %v1718 = vpop.f32.mrb[0].mxu0
    %1719 = vmatprep.mubr.bf16.mxu0 0
    %1720 = vmatmul.mubr.bf16.gmra.mrb[0].mxu0 %v1658
    %v1721 = vpop.f32.mrb[0].mxu0
    %v1722 = vadd.f32 %v1633, %v1721
    %v1723 = vpop.f32.mrb[0].mxu0
    %v1724 = vpop.f32.mrb[0].mxu0
    %v1725 = vadd.f32 %v1637, %v1724
    %v1726 = vpop.f32.mrb[0].mxu0
    %1727 = vdwg.mxu0
    %v1728 = vsub.f32 0.0, %v1698
    %v1729 = vsub.f32 0.0, %v1701
    %v1730 = vsub.f32 0.0, %v1706
    %v1731 = vsub.f32 0.0, %v1709
    %v1732 = vsub.f32 0.0, %v1714
    %v1733 = vsub.f32 0.0, %v1717
    %v1734 = vsub.f32 0.0, %v1722
    %v1735 = vsub.f32 0.0, %v1725
    %v1736 = vmul.f32 %v1728, 1.442695
    %v1737 = vpow.pop %v1736
    %v1738 = vmul.f32 %v1729, 1.442695
    %v1739 = vpow.pop %v1738
    %v1740 = vmul.f32 %v1730, 1.442695
    %v1741 = vpow.pop %v1740
    %v1742 = vmul.f32 %v1731, 1.442695
    %v1743 = vpow.pop %v1742
    %v1744 = vmul.f32 %v1732, 1.442695
    %v1745 = vpow.pop %v1744
    %v1746 = vmul.f32 %v1733, 1.442695
    %v1747 = vpow.pop %v1746
    %v1748 = vmul.f32 %v1734, 1.442695
    %v1749 = vpow.pop %v1748
    %v1750 = vmul.f32 %v1735, 1.442695
    %v1751 = vpow.pop %v1750
    %v1752 = vadd.f32 %v1737, 1.0
    %v1753 = vadd.f32 %v1739, 1.0
    %v1754 = vadd.f32 %v1741, 1.0
    %v1755 = vadd.f32 %v1743, 1.0
    %v1756 = vadd.f32 %v1745, 1.0
    %v1757 = vadd.f32 %v1747, 1.0
    %v1758 = vadd.f32 %v1749, 1.0
    %v1759 = vadd.f32 %v1751, 1.0
    %v1760 = vrcp.pop %v1752
    %v1761 = vmul.f32 1.0, %v1760
    %v1762 = vrcp.pop %v1753
    %v1763 = vmul.f32 1.0, %v1762
    %v1764 = vrcp.pop %v1754
    %v1765 = vmul.f32 1.0, %v1764
    %v1766 = vrcp.pop %v1755
    %v1767 = vmul.f32 1.0, %v1766
    %v1768 = vrcp.pop %v1756
    %v1769 = vmul.f32 1.0, %v1768
    %v1770 = vrcp.pop %v1757
    %v1771 = vmul.f32 1.0, %v1770
    %v1772 = vrcp.pop %v1758
    %v1773 = vmul.f32 1.0, %v1772
    %v1774 = vrcp.pop %v1759
    %v1775 = vmul.f32 1.0, %v1774
    %v1776 = vld [vmem:[%s10] sm:$0xf]
    %v1779 = vunpack.c.l.s4 1983009808
    %v1780 = vunpack.c.0.s8 %v1779
    %v1781 = vlaneseq
    %v1782 = vshrl.u32 %v1781, 7
    %v1783 = vsub.s32 %v1780, %v1782
    %v1784 = vrot.slane %v1776, %v1783
    %v1785 = vcombine.high %v1784, %v1784
    %vm1786 = vcmask 15360
    %v1788 = vsel %vm1786, %v1761, 0
    %v1791 = vsel %vm1786, %v1763, 0
    %v1794 = vsel %vm1786, %v1765, 0
    %v1797 = vsel %vm1786, %v1767, 0
    %v1800 = vsel %vm1786, %v1769, 0
    %v1803 = vsel %vm1786, %v1771, 0
    %v1806 = vsel %vm1786, %v1773, 0
    %v1809 = vsel %vm1786, %v1775, 0
    %vm1811 = vcmask 1041408
    %v1812 = vsel %vm1811, %v1784, 0
    %v1814 = vsel %vm1811, %v1785, 0
    %1816 = vmatprep.subr.mxu0 %v1814
    %1817 = vmatpush1.msra.mxu0 %v1812
    %1818 = vmatprep.subr.mxu0 0.0
    %1819 = vmatpush1.msra.mxu0 0.0
    %1820 = vmatprep.subr.mxu0 0.0
    %1821 = vmatpush1.msra.mxu0 0.0
    %1822 = vmatprep.subr.mxu0 0.0
    %1823 = vmatpush1.msra.mxu0 0.0
    %1824 = vmatprep.subr.mxu0 0.0
    %1825 = vmatpush1.msra.mxu0 0.0
    %1826 = vmatprep.subr.mxu0 0.0
    %1827 = vmatpush1.msra.mxu0 0.0
    %1828 = vmatprep.subr.mxu0 0.0
    %1829 = vmatpush1.msra.mxu0 0.0
    %1830 = vmatprep.subr.mxu0 0.0
    %1831 = vmatpush1.msra.mxu0 0.0
    %1832 = vmatprep.subr.mxu0 0.0
    %1833 = vmatpush1.msra.mxu0 0.0
    %1834 = vmatprep.subr.mxu0 0.0
    %1835 = vmatpush1.msra.mxu0 0.0
    %1836 = vmatprep.subr.mxu0 0.0
    %1837 = vmatpush1.msra.mxu0 0.0
    %1838 = vmatprep.subr.mxu0 0.0
    %1839 = vmatpush1.msra.mxu0 0.0
    %1840 = vmatprep.subr.mxu0 0.0
    %1841 = vmatpush1.msra.mxu0 0.0
    %1842 = vmatprep.subr.mxu0 0.0
    %1843 = vmatpush1.msra.mxu0 0.0
    %1844 = vmatprep.subr.mxu0 0.0
    %1845 = vmatpush1.msra.mxu0 0.0
    %1846 = vmatprep.subr.mxu0 0.0
    %1847 = vmatpush1.msra.mxu0 0.0
    %1848 = vmatprep.subr.mxu0 0.0
    %1849 = vmatpush1.msra.mxu0 0.0
    %1850 = vmatprep.subr.mxu0 0.0
    %1851 = vmatpush1.msra.mxu0 0.0
    %1852 = vmatprep.subr.mxu0 0.0
    %1853 = vmatpush1.msra.mxu0 0.0
    %1854 = vmatprep.subr.mxu0 0.0
    %1855 = vmatpush1.msra.mxu0 0.0
    %1856 = vmatprep.subr.mxu0 0.0
    %1857 = vmatpush1.msra.mxu0 0.0
    %1858 = vmatprep.subr.mxu0 0.0
    %1859 = vmatpush1.msra.mxu0 0.0
    %1860 = vmatprep.subr.mxu0 0.0
    %1861 = vmatpush1.msra.mxu0 0.0
    %1862 = vmatprep.subr.mxu0 0.0
    %1863 = vmatpush1.msra.mxu0 0.0
    %1864 = vmatprep.subr.mxu0 0.0
    %1865 = vmatpush1.msra.mxu0 0.0
    %1866 = vmatprep.subr.mxu0 0.0
    %1867 = vmatpush1.msra.mxu0 0.0
    %1868 = vmatprep.subr.mxu0 0.0
    %1869 = vmatpush1.msra.mxu0 0.0
    %1870 = vmatprep.subr.mxu0 0.0
    %1871 = vmatpush1.msra.mxu0 0.0
    %1872 = vmatprep.subr.mxu0 0.0
    %1873 = vmatpush1.msra.mxu0 0.0
    %1874 = vmatprep.subr.mxu0 0.0
    %1875 = vmatpush1.msra.mxu0 0.0
    %1876 = vmatprep.subr.mxu0 0.0
    %1877 = vmatpush1.msra.mxu0 0.0
    %1878 = vmatprep.subr.mxu0 0.0
    %1879 = vmatpush1.msra.mxu0 0.0
    %1880 = vmatprep.mubr.f32.mxu0 0.0
    %1881 = vmatmul.mubr.f32.gmra.mrb[0].mxu0 %v1788
    %v1882 = vpop.f32.mrb[0].mxu0
    %v1883 = vadd.f32 0.0, %v1882
    %v1884 = vpop.f32.mrb[0].mxu0
    %v1885 = vadd.f32 0.0, %v1884
    %1886 = vmatprep.mubr.f32.mxu0 0.0
    %1887 = vmatmul.mubr.f32.gmra.mrb[0].mxu0 %v1791
    %v1888 = vpop.f32.mrb[0].mxu0
    %v1889 = vadd.f32 0.0, %v1888
    %v1890 = vpop.f32.mrb[0].mxu0
    %v1891 = vadd.f32 0.0, %v1890
    %1892 = vmatprep.mubr.f32.mxu0 0.0
    %1893 = vmatmul.mubr.f32.gmra.mrb[0].mxu0 %v1794
    %v1894 = vpop.f32.mrb[0].mxu0
    %v1895 = vadd.f32 0.0, %v1894
    %v1896 = vpop.f32.mrb[0].mxu0
    %v1897 = vadd.f32 0.0, %v1896
    %1898 = vmatprep.mubr.f32.mxu0 0.0
    %1899 = vmatmul.mubr.f32.gmra.mrb[0].mxu0 %v1797
    %v1900 = vpop.f32.mrb[0].mxu0
    %v1901 = vadd.f32 0.0, %v1900
    %v1902 = vpop.f32.mrb[0].mxu0
    %v1903 = vadd.f32 0.0, %v1902
    %1904 = vmatprep.mubr.f32.mxu0 0.0
    %1905 = vmatmul.mubr.f32.gmra.mrb[0].mxu0 %v1800
    %v1906 = vpop.f32.mrb[0].mxu0
    %v1907 = vadd.f32 0.0, %v1906
    %v1908 = vpop.f32.mrb[0].mxu0
    %v1909 = vadd.f32 0.0, %v1908
    %1910 = vmatprep.mubr.f32.mxu0 0.0
    %1911 = vmatmul.mubr.f32.gmra.mrb[0].mxu0 %v1803
    %v1912 = vpop.f32.mrb[0].mxu0
    %v1913 = vadd.f32 0.0, %v1912
    %v1914 = vpop.f32.mrb[0].mxu0
    %v1915 = vadd.f32 0.0, %v1914
    %1916 = vmatprep.mubr.f32.mxu0 0.0
    %1917 = vmatmul.mubr.f32.gmra.mrb[0].mxu0 %v1806
    %v1918 = vpop.f32.mrb[0].mxu0
    %v1919 = vadd.f32 0.0, %v1918
    %v1920 = vpop.f32.mrb[0].mxu0
    %v1921 = vadd.f32 0.0, %v1920
    %1922 = vmatprep.mubr.f32.mxu0 0.0
    %1923 = vmatmul.mubr.f32.gmra.mrb[0].mxu0 %v1809
    %v1924 = vpop.f32.mrb[0].mxu0
    %v1925 = vadd.f32 0.0, %v1924
    %v1926 = vpop.f32.mrb[0].mxu0
    %v1927 = vadd.f32 0.0, %v1926
    %1928 = vdwg.mxu0
    %v1929 = vmul.f32 %v1145, %v1883
    %v1930 = vmul.f32 %v1146, %v1885
    %v1931 = vmul.f32 %v1147, %v1889
    %v1932 = vmul.f32 %v1148, %v1891
    %v1933 = vmul.f32 %v1149, %v1895
    %v1934 = vmul.f32 %v1150, %v1897
    %v1935 = vmul.f32 %v1151, %v1901
    %v1936 = vmul.f32 %v1152, %v1903
    %v1937 = vmul.f32 %v1153, %v1907
    %v1938 = vmul.f32 %v1154, %v1909
    %v1939 = vmul.f32 %v1155, %v1913
    %v1940 = vmul.f32 %v1156, %v1915
    %v1941 = vmul.f32 %v1157, %v1919
    %v1942 = vmul.f32 %v1158, %v1921
    %v1943 = vmul.f32 %v1159, %v1925
    %v1944 = vmul.f32 %v1160, %v1927
    %v1945 = vadd.f32 %v1929, %v40
    %v1946 = vadd.f32 %v1930, %v41
    %v1947 = vadd.f32 %v1931, %v42
    %v1948 = vadd.f32 %v1932, %v43
    %v1949 = vadd.f32 %v1933, %v44
    %v1950 = vadd.f32 %v1934, %v45
    %v1951 = vadd.f32 %v1935, %v46
    %v1952 = vadd.f32 %v1936, %v47
    %v1953 = vadd.f32 %v1937, %v48
    %v1954 = vadd.f32 %v1938, %v49
    %v1955 = vadd.f32 %v1939, %v50
    %v1956 = vadd.f32 %v1940, %v51
    %v1957 = vadd.f32 %v1941, %v52
    %v1958 = vadd.f32 %v1942, %v53
    %v1959 = vadd.f32 %v1943, %v54
    %v1960 = vadd.f32 %v1944, %v55
    %1961 = vst [vmem:[#allocation2] sm:$0xff] %v1945
    %1962 = vst [vmem:[#allocation2 + $0x8] sm:$0xff] %v1946
    %1963 = vst [vmem:[#allocation2 + $0x10] sm:$0xff] %v1947
    %1964 = vst [vmem:[#allocation2 + $0x18] sm:$0xff] %v1948
    %1965 = vst [vmem:[#allocation2 + $0x20] sm:$0xff] %v1949
    %1966 = vst [vmem:[#allocation2 + $0x28] sm:$0xff] %v1950
    %1967 = vst [vmem:[#allocation2 + $0x30] sm:$0xff] %v1951
    %1968 = vst [vmem:[#allocation2 + $0x38] sm:$0xff] %v1952
    %1969 = vst [vmem:[#allocation2 + $0x40] sm:$0xff] %v1953
    %1970 = vst [vmem:[#allocation2 + $0x48] sm:$0xff] %v1954
    %1971 = vst [vmem:[#allocation2 + $0x50] sm:$0xff] %v1955
    %1972 = vst [vmem:[#allocation2 + $0x58] sm:$0xff] %v1956
    %1973 = vst [vmem:[#allocation2 + $0x60] sm:$0xff] %v1957
    %1974 = vst [vmem:[#allocation2 + $0x68] sm:$0xff] %v1958
    %1975 = vst [vmem:[#allocation2 + $0x70] sm:$0xff] %v1959
    %1976 = vst [vmem:[#allocation2 + $0x78] sm:$0xff] %v1960
    // Predicated region
    $region46: #{tpu_custom_call.1} parent=1 // pred_check
      _
    $region47: #{tpu_custom_call.1} parent=1 // pred_check_branch
      %1978 = sbr.rel (0) target = $region49
    $region48: #{tpu_custom_call.1} parent=1 // pred_region
      %s1980 = ssub.s32 2048, 2048
      %1981 = vsyncadd [#allocation3], %s1980
      %s1982 = sshll.u32 [#allocation2], 4
      %s1983 = int_to_ptr.vmem [resolvable:$true] %s1982
      %1988 = dma.vmem_to_hbm [thread:$0]  %s1983, 2048, %s11, [#allocation3], 256, 256, 16
    $region49: #{tpu_custom_call.1} parent=1 // pred_fallthru
      _
    // Predicated region
    $region50: #{tpu_custom_call.1} parent=1 // pred_check
      _
    $region51: #{tpu_custom_call.1} parent=1 // pred_check_branch
      %1990 = sbr.rel (0) target = $region53
    $region52: #{tpu_custom_call.1} parent=1 // pred_region
      %1991 = dma.done [#allocation3], 2048
    $region53: #{tpu_custom_call.1} parent=1 // pred_fallthru
      _
    %1992 = vsyncpa [#allocation3], 1

</llo_original>
